<compile_context>
chip_gen: v5e
topology: v5e:2x2
jax: 0.10.0
libtpu: 0.0.40
codegen_flags: <defaults>
</compile_context>

<pallas_src>
import functools
import math

import jax
import jax.numpy as jnp
from jax.experimental import pallas as pl
from jax.experimental.pallas import tpu as pltpu

_LANE = 128
_SUBLANE = 8
_NUM_CORES = 2          # leading "parallel" grid axis; shards across TCs on v7x
_MAX_BLOCK_ROWS = 512   # 512 x 128 f32 = 256 KiB per block per input
_MIN_GOOD_BLOCK_ROWS = 256
_CHUNK_ROWS = 64        # strip-mine granule inside the kernel

_CLAMP_LO = 1e-4
_CLAMP_HI = 1.0 - 1e-4
_LOG_LO = math.log(_CLAMP_LO)
_LOG_HI = math.log(_CLAMP_HI)


def _cdiv(a, b):
    return -(-a // b)


def _round_up(x, m):
    return _cdiv(x, m) * m


def _slab_geometry(n, num_cores=_NUM_CORES, max_block_rows=_MAX_BLOCK_ROWS,
                   min_good_block=_MIN_GOOD_BLOCK_ROWS):
    """(padded slab rows, block rows) with rows % (num_cores * block) == 0."""
    unit = _SUBLANE * num_cores
    base = _round_up(_cdiv(n, _LANE), unit)

    def best_block(rows):
        per_core = rows // num_cores
        cand = min(max_block_rows, per_core)
        cand -= cand % _SUBLANE
        while cand > _SUBLANE and per_core % cand != 0:
            cand -= _SUBLANE
        return cand

    rows, block = base, best_block(base)
    if block < min(min_good_block, base // num_cores):
        # Allow a bounded amount of zero-contribution row padding to reach a
        # block size that amortises the ~0.35us/step pipeline overhead.
        max_extra = max(unit, base // 16)
        extra = unit
        while extra <= max_extra:
            cand_rows = base + extra
            cand_block = best_block(cand_rows)
            if cand_block > block:
                rows, block = cand_rows, cand_block
                if block >= min_good_block:
                    break
            extra += unit
    return rows, block


def _to_slab(a, rows, pad_value):
    """Flatten `a` to a (rows, 128) slab in its NATIVE dtype (cast in-kernel)."""
    f = jnp.reshape(a, (-1,))
    n = f.shape[0]
    padded = rows * _LANE
    if padded != n:  # only copies when alignment padding is actually needed
        f = jnp.concatenate([f, jnp.full((padded - n,), pad_value, dtype=f.dtype)])
    return jnp.reshape(f, (rows, _LANE))


def _colsum(x):
    """Reduce a (rows, 128) value (rows multiple of 8) to (8, 128) with VALU adds."""
    r = x.shape[0] // _SUBLANE
    return jnp.sum(jnp.reshape(x, (r, _SUBLANE, _LANE)), axis=0)


# ----------------------------------------------------------------------------
# Pallas kernel
# ----------------------------------------------------------------------------
def _focal_fused_kernel(group_sizes, group_sigmoid, chunk_rows, *refs):
    """Fused CornerNet focal-loss partial sums for several pred groups.

    refs = gt_refs[0..G-1], pred_refs[0..P-1], acc_ref.
    acc_ref is this core's (P+G, 8, 128) accumulator block of the output:
      acc_ref[p]     = running sum of (pos_term + neg_term) for pred p,
      acc_ref[P + g] = running num_pos for gt g.
    Padding convention: gt pad = 2.0 and pred pad = 0.5 contribute exactly 0.
    """
    n_gt = len(group_sizes)
    n_pred = sum(group_sizes)
    gt_refs = refs[:n_gt]
    pred_refs = refs[n_gt:n_gt + n_pred]
    acc_ref = refs[n_gt + n_pred]

    @pl.when(pl.program_id(1) == 0)
    def _init():
        acc_ref[...] = jnp.zeros_like(acc_ref)

    block_rows = gt_refs[0].shape[0]
    # Strip-mine the block so per-pred intermediates stay in vregs rather than
    # being staged through VMEM.
    for off in range(0, block_rows, chunk_rows):
        rows = min(chunk_rows, block_rows - off)
        p_idx = 0
        for g, size in enumerate(group_sizes):
            gt = gt_refs[g][off:off + rows, :].astype(jnp.float32)
            pos = (gt == 1.0).astype(jnp.float32)
            neg = (gt < 1.0).astype(jnp.float32)
            neg_w = jnp.square(jnp.square(1.0 - gt)) * neg   # (1-gt)^4 on negatives
            acc_ref[n_pred + g] = acc_ref[n_pred + g] + _colsum(pos)
            for _ in range(size):
                x = pred_refs[p_idx][off:off + rows, :].astype(jnp.float32)
                if group_sigmoid[g]:
                    # _sigmoid(x) = clamp(sigmoid(x), 1e-4, 1-1e-4), then
                    # log(p) / log(1-p).  Share one exp and one log:
                    #   log(sigmoid(x))   = min(x, 0)  - log(1 + exp(-|x|))
                    #   log(1-sigmoid(x)) = min(-x, 0) - log(1 + exp(-|x|))
                    e = jnp.exp(-jnp.abs(x))
                    log1pe = jnp.log(1.0 + e)
                    log_p = jnp.minimum(x, 0.0) - log1pe
                    log_1mp = jnp.minimum(-x, 0.0) - log1pe
                    p = jnp.where(x >= 0.0, 1.0, e) * pl.reciprocal(1.0 + e,
                                                                    approx=True)
                    below = p < _CLAMP_LO
                    above = p > _CLAMP_HI
                    p = jnp.clip(p, _CLAMP_LO, _CLAMP_HI)
                    log_p = jnp.where(below, _LOG_LO,
                                      jnp.where(above, _LOG_HI, log_p))
                    log_1mp = jnp.where(above, _LOG_LO,
                                        jnp.where(below, _LOG_HI, log_1mp))
                else:
                    # Grouping/region maps are already probabilities; the
                    # reference applies no clamp on this path.
                    p = x
                    log_p = jnp.log(p)
                    log_1mp = jnp.log(1.0 - p)
                term = (log_p * jnp.square(1.0 - p) * pos
                        + log_1mp * jnp.square(p) * neg_w)
                acc_ref[p_idx] = acc_ref[p_idx] + _colsum(term)
                p_idx += 1


# ----------------------------------------------------------------------------
# Wrappers
# ----------------------------------------------------------------------------
def _fused_neg_loss(tasks):
    """Pallas CornerNet `_neg_loss` for a list of (preds, gt, apply_sigmoid).

    Tasks whose slab geometry matches share a single pallas_call (one per
    bucket).  Returns one loss per task, in task order.
    """
    buckets = {}
    for t_idx, (preds, gt, apply_sig) in enumerate(tasks):
        key = _slab_geometry(int(gt.size))
        buckets.setdefault(key, []).append((t_idx, list(preds), gt, bool(apply_sig)))

    losses = [None] * len(tasks)
    for (rows, block), items in buckets.items():
        group_sizes = tuple(len(p) for _, p, _, _ in items)
        group_sigmoid = tuple(s for _, _, _, s in items)
        gts = [g for _, _, g, _ in items]
        preds_flat = [p for _, ps, _, _ in items for p in ps]
        n_gt, n_pred = len(gts), len(preds_flat)
        n_acc = n_pred + n_gt

        gt_slabs = [_to_slab(g, rows, 2.0) for g in gts]
        pred_slabs = [_to_slab(p, rows, 0.5) for p in preds_flat]

        steps = rows // (block * _NUM_CORES)
        chunk = min(_CHUNK_ROWS, block)

        # VMEM budget: double-buffered input blocks + per-core accumulator.
        in_bytes = sum(2 * block * _LANE * s.dtype.itemsize
                       for s in gt_slabs + pred_slabs)
        acc_bytes = 2 * n_acc * _SUBLANE * _LANE * 4
        need = in_bytes + acc_bytes + (4 << 20)          # + intermediates headroom
        vmem_limit = int(min(need, 48 << 20)) if need > (16 << 20) else None

        n_elems = rows * _LANE
        n_sig = sum(sz for sz, sg in zip(group_sizes, group_sigmoid) if sg)
        cost = pl.CostEstimate(
            flops=int(n_elems * (30 * n_pred + 10 * n_gt)),
            transcendentals=int(n_elems * (3 * n_sig + 2 * (n_pred - n_sig))),
            bytes_accessed=int(sum(int(s.size) * s.dtype.itemsize
                                   for s in gt_slabs + pred_slabs)),
        )

        acc = pl.pallas_call(
            functools.partial(_focal_fused_kernel, group_sizes, group_sigmoid, chunk),
            out_shape=jax.ShapeDtypeStruct(
                (_NUM_CORES, n_acc, _SUBLANE, _LANE), jnp.float32),
            grid=(_NUM_CORES, steps),
            in_specs=[pl.BlockSpec((block, _LANE),
                                   lambda c, i, s=steps: (c * s + i, 0))
                      ] * (n_gt + n_pred),
            out_specs=pl.BlockSpec((None, n_acc, _SUBLANE, _LANE),
                                   lambda c, i: (c, 0, 0, 0)),
            compiler_params=pltpu.CompilerParams(
                dimension_semantics=("parallel", "arbitrary"),
                vmem_limit_bytes=vmem_limit),
            cost_estimate=cost,
        )(*gt_slabs, *pred_slabs)

        partial = jnp.sum(acc, axis=(0, 2, 3))   # (n_pred + n_gt,)

        p_idx = 0
        for k, (t_idx, preds, _, _) in enumerate(items):
            # num_pos == 0  =>  pos_sum == 0, so -(sum)/max(num_pos, 1) matches
            # both branches of the reference implementation exactly.
            denom = jnp.maximum(partial[n_pred + k], 1.0)
            gl = jnp.float32(0.0)
            for _ in range(len(preds)):
                gl = gl - partial[p_idx] / denom
                p_idx += 1
            losses[t_idx] = gl
    return losses


def _regr_loss(regr, gt_regr, mask):
    """CornerNet `_regr_loss` (masked smooth-L1, sum-reduced, /(num + 1e-4)).

    The regr tensors are (B, M, 2) -- a few KiB -- so a dedicated pallas_call
    would be ~100% launch overhead; plain JAX is the right tool here.
    """
    # TODO(synk): assumes a 0/1 mask (true for CornerNet); the reference's
    # boolean-gather is reproduced by multiplying by the mask.
    num = jnp.sum(mask.astype(jnp.float32))
    m = jnp.broadcast_to(mask.astype(jnp.float32)[..., None], gt_regr.shape)
    d = regr.astype(jnp.float32) - gt_regr.astype(jnp.float32)
    ad = jnp.abs(d)
    sl1 = jnp.where(ad < 1.0, 0.5 * d * d, ad - 0.5)   # smooth_l1, beta=1, sum
    return jnp.sum(sl1 * m) / (num + 1e-4)


# ----------------------------------------------------------------------------
# AELoss forward
# ----------------------------------------------------------------------------
class AELoss:
    """Forward-only AELoss (no learnable parameters).

    TODO(synk): pallas_call has no autodiff rule; a training-usable version
    needs a custom_vjp (or a pure-JAX fallback) for the backward pass.
    """

    def __init__(self, pull_weight=1, push_weight=1, regr_weight=1):
        self.pull_weight = pull_weight
        self.push_weight = push_weight
        self.regr_weight = regr_weight

    def __call__(self, outs, targets):
        outs = list(outs)
        region_labels = outs.pop(-1)
        region_outs = outs.pop(-1)       # list of prob maps (already sigmoided)
        grouping_labels = outs.pop(-1)
        grouping_outs = outs.pop(-1)     # list of prob maps (already sigmoided)
        stride = 4
        tl_heats = outs[0::stride]
        br_heats = outs[1::stride]
        tl_regrs = outs[2::stride]
        br_regrs = outs[3::stride]

        gt_tl_heat = targets[0]
        gt_br_heat = targets[1]
        gt_mask = targets[2]
        gt_tl_regr = targets[3]
        gt_br_regr = targets[4]

        # _sigmoid(t) (sigmoid + clamp) is fused into the focal kernel; all
        # focal terms with matching slab geometry share ONE pallas_call
        # (heats + grouping + region in the demo).
        tl_loss, br_loss, grouping_loss, region_loss = _fused_neg_loss([
            (tl_heats, gt_tl_heat, True),
            (br_heats, gt_br_heat, True),
            (list(grouping_outs), grouping_labels, False),
            (list(region_outs), region_labels, False),
        ])
        focal_loss = tl_loss + br_loss

        regr_loss = jnp.float32(0.0)
        for tl_regr, br_regr in zip(tl_regrs, br_regrs):
            regr_loss = regr_loss + _regr_loss(tl_regr, gt_tl_regr, gt_mask)
            regr_loss = regr_loss + _regr_loss(br_regr, gt_br_regr, gt_mask)
        regr_loss = self.regr_weight * regr_loss

        n = len(tl_heats)
        loss = (focal_loss + grouping_loss + region_loss + regr_loss) / n
        return (
            loss[None],
            (focal_loss / n)[None],
            (grouping_loss / n)[None],
            (region_loss / n)[None],
            (regr_loss / n)[None],
        )


# ----------------------------------------------------------------------------
# Example run
# ----------------------------------------------------------------------------
if __name__ == "__main__":
    key = jax.random.PRNGKey(0)
    B, C, H, W = 2, 4, 16, 16   # batch, heat classes, spatial
    M = 8                       # max number of tagged objects
    nstack = 2                  # two hourglass/DLA stacks

    keys = list(jax.random.split(key, 32))
    ki = iter(keys)

    def nxt():
        return next(ki)

    def make_gt_heat(shape):
        g = jax.random.uniform(nxt(), shape, jnp.float32, 0.0, 0.9)
        g = g.at[..., 4, 4].set(1.0)     # plant exact-1.0 positive peaks
        g = g.at[..., 10, 7].set(1.0)
        return g

    # outs: [tl_heat, br_heat, tl_regr, br_regr] * nstack + grouping/region outs & labels
    outs = []
    for _ in range(nstack):
        outs.append(jax.random.normal(nxt(), (B, C, H, W), jnp.float32))  # tl heat logits
        outs.append(jax.random.normal(nxt(), (B, C, H, W), jnp.float32))  # br heat logits
        outs.append(jax.random.normal(nxt(), (B, M, 2), jnp.float32))     # tl regr (gathered)
        outs.append(jax.random.normal(nxt(), (B, M, 2), jnp.float32))     # br regr (gathered)

    def make_probs(shape):
        return jnp.clip(jax.nn.sigmoid(jax.random.normal(nxt(), shape, jnp.float32)),
                        1e-4, 1.0 - 1e-4)

    # TODO(synk): grouping/region outputs are assumed to be length-1 lists of
    # already-sigmoided probability maps, matching how the model feeds them.
    grouping_outs = [make_probs((B, 1, H, W))]
    grouping_labels = make_gt_heat((B, 1, H, W))
    region_outs = [make_probs((B, C, H, W))]
    region_labels = make_gt_heat((B, C, H, W))
    outs += [grouping_outs, grouping_labels, region_outs, region_labels]

    gt_tl_heat = make_gt_heat((B, C, H, W))
    gt_br_heat = make_gt_heat((B, C, H, W))
    gt_mask = jnp.tile((jnp.arange(M) < 3).astype(jnp.float32)[None, :], (B, 1))
    gt_tl_regr = jax.random.uniform(nxt(), (B, M, 2), jnp.float32)
    gt_br_regr = jax.random.uniform(nxt(), (B, M, 2), jnp.float32)
    targets = [gt_tl_heat, gt_br_heat, gt_mask, gt_tl_regr, gt_br_regr]

    ae_loss = AELoss(pull_weight=1, push_weight=1, regr_weight=1)
    results = ae_loss(outs, targets)
    results = jax.block_until_ready(results)

    assert all(r.shape == (1,) for r in results)
    assert all(bool(jnp.isfinite(r).all()) for r in results)
    print("KERNEL_OK")
</pallas_src>

<mosaic_0001>
module attributes {stable_mosaic.version = 11 : i64} {
  func.func @_focal_fused_kernel(%arg0: i32, %arg1: i32, %arg2: memref<8x128xf32, #tpu.memory_space<vmem>>, %arg3: memref<8x128xf32, #tpu.memory_space<vmem>>, %arg4: memref<8x128xf32, #tpu.memory_space<vmem>>, %arg5: memref<8x128xf32, #tpu.memory_space<vmem>>, %arg6: memref<8x128xf32, #tpu.memory_space<vmem>>, %arg7: memref<8x128xf32, #tpu.memory_space<vmem>>, %arg8: memref<8x128xf32, #tpu.memory_space<vmem>>, %arg9: memref<8x128xf32, #tpu.memory_space<vmem>>, %arg10: memref<8x128xf32, #tpu.memory_space<vmem>>, %arg11: memref<8x128xf32, #tpu.memory_space<vmem>>, %arg12: memref<1x10x8x128xf32, #tpu.memory_space<vmem>>) attributes {dimension_semantics = [#tpu.dimension_semantics<parallel>, #tpu.dimension_semantics<arbitrary>], iteration_bounds = array<i64: 2, 1>, scalar_prefetch = 0 : i64, scratch_operands = 0 : i64, tpu.core_type = #tpu.core_type<tc>, window_params = [{transform_indices = @transform_0, window_bounds = array<i64: 8, 128>}, {transform_indices = @transform_1, window_bounds = array<i64: 8, 128>}, {transform_indices = @transform_2, window_bounds = array<i64: 8, 128>}, {transform_indices = @transform_3, window_bounds = array<i64: 8, 128>}, {transform_indices = @transform_4, window_bounds = array<i64: 8, 128>}, {transform_indices = @transform_5, window_bounds = array<i64: 8, 128>}, {transform_indices = @transform_6, window_bounds = array<i64: 8, 128>}, {transform_indices = @transform_7, window_bounds = array<i64: 8, 128>}, {transform_indices = @transform_8, window_bounds = array<i64: 8, 128>}, {transform_indices = @transform_9, window_bounds = array<i64: 8, 128>}, {transform_indices = @transform_10, window_bounds = array<i64: 1, 10, 8, 128>}]} {
    %c0_i32 = arith.constant 0 : i32
    %0 = arith.cmpi eq, %arg1, %c0_i32 : i32
    %1 = arith.extui %0 : i1 to i32
    %c0_i32_0 = arith.constant 0 : i32
    %2 = arith.cmpi ne, %1, %c0_i32_0 : i32
    scf.if %2 {
      %cst_184 = arith.constant 0.000000e+00 : f32
      %363 = vector.broadcast %cst_184 : f32 to vector<10x8x128xf32>
      %c0_185 = arith.constant 0 : index
      %c0_186 = arith.constant 0 : index
      %c0_187 = arith.constant 0 : index
      %c0_188 = arith.constant 0 : index
      %364 = vector.load %arg12[%c0_185, %c0_186, %c0_187, %c0_188] : memref<1x10x8x128xf32, #tpu.memory_space<vmem>>, vector<1x10x8x128xf32>
      %365 = vector.shape_cast %364 : vector<1x10x8x128xf32> to vector<10x8x128xf32>
      %366 = vector.shape_cast %363 : vector<10x8x128xf32> to vector<1x10x8x128xf32>
      tpu.vector_store %arg12[%c0_185, %c0_186, %c0_187, %c0_188], %366 {strides = array<i32>} : memref<1x10x8x128xf32, #tpu.memory_space<vmem>>, vector<1x10x8x128xf32>,
    } else {
    }
    %c0 = arith.constant 0 : index
    %c0_1 = arith.constant 0 : index
    %3 = vector.load %arg2[%c0, %c0_1] : memref<8x128xf32, #tpu.memory_space<vmem>>, vector<8x128xf32>
    %cst = arith.constant 1.000000e+00 : f32
    %4 = vector.broadcast %cst : f32 to vector<8x128xf32>
    %5 = arith.cmpf oeq, %3, %4 : vector<8x128xf32>
    %6 = arith.extui %5 : vector<8x128xi1> to vector<8x128xi32>
    %7 = arith.sitofp %6 : vector<8x128xi32> to vector<8x128xf32>
    %cst_2 = arith.constant 1.000000e+00 : f32
    %8 = vector.broadcast %cst_2 : f32 to vector<8x128xf32>
    %9 = arith.cmpf olt, %3, %8 : vector<8x128xf32>
    %10 = arith.extui %9 : vector<8x128xi1> to vector<8x128xi32>
    %11 = arith.sitofp %10 : vector<8x128xi32> to vector<8x128xf32>
    %cst_3 = arith.constant 1.000000e+00 : f32
    %12 = vector.broadcast %cst_3 : f32 to vector<8x128xf32>
    %13 = arith.subf %12, %3 : vector<8x128xf32>
    %14 = arith.mulf %13, %13 : vector<8x128xf32>
    %15 = arith.mulf %14, %14 : vector<8x128xf32>
    %16 = arith.mulf %15, %11 : vector<8x128xf32>
    %c0_4 = arith.constant 0 : index
    %c6 = arith.constant 6 : index
    %c0_5 = arith.constant 0 : index
    %c0_6 = arith.constant 0 : index
    %17 = vector.load %arg12[%c0_4, %c6, %c0_5, %c0_6] : memref<1x10x8x128xf32, #tpu.memory_space<vmem>>, vector<1x1x8x128xf32>
    %18 = vector.shape_cast %17 : vector<1x1x8x128xf32> to vector<8x128xf32>
    %19 = vector.shape_cast %7 : vector<8x128xf32> to vector<1x8x128xf32>
    %cst_7 = arith.constant dense<0.000000e+00> : vector<8x128xf32>
    %20 = vector.multi_reduction <add>, %19, %cst_7 [0] : vector<1x8x128xf32> to vector<8x128xf32>
    %21 = arith.addf %18, %20 : vector<8x128xf32>
    %c0_8 = arith.constant 0 : index
    %c6_9 = arith.constant 6 : index
    %c0_10 = arith.constant 0 : index
    %c0_11 = arith.constant 0 : index
    %22 = vector.load %arg12[%c0_8, %c6_9, %c0_10, %c0_11] : memref<1x10x8x128xf32, #tpu.memory_space<vmem>>, vector<1x1x8x128xf32>
    %23 = vector.shape_cast %22 : vector<1x1x8x128xf32> to vector<8x128xf32>
    %24 = vector.shape_cast %21 : vector<8x128xf32> to vector<1x1x8x128xf32>
    tpu.vector_store %arg12[%c0_8, %c6_9, %c0_10, %c0_11], %24 {strides = array<i32>} : memref<1x10x8x128xf32, #tpu.memory_space<vmem>>, vector<1x1x8x128xf32>,
    %c0_12 = arith.constant 0 : index
    %c0_13 = arith.constant 0 : index
    %25 = vector.load %arg6[%c0_12, %c0_13] : memref<8x128xf32, #tpu.memory_space<vmem>>, vector<8x128xf32>
    %26 = math.absf %25 : vector<8x128xf32>
    %cst_14 = arith.constant 0.000000e+00 : f32
    %27 = vector.broadcast %cst_14 : f32 to vector<8x128xf32>
    %28 = arith.subf %27, %26 : vector<8x128xf32>
    %29 = math.exp %28 : vector<8x128xf32>
    %cst_15 = arith.constant 1.000000e+00 : f32
    %30 = vector.broadcast %cst_15 : f32 to vector<8x128xf32>
    %31 = arith.addf %30, %29 : vector<8x128xf32>
    %32 = math.log %31 : vector<8x128xf32>
    %cst_16 = arith.constant 0.000000e+00 : f32
    %33 = vector.broadcast %cst_16 : f32 to vector<8x128xf32>
    %34 = arith.minimumf %25, %33 : vector<8x128xf32>
    %35 = arith.subf %34, %32 : vector<8x128xf32>
    %cst_17 = arith.constant 0.000000e+00 : f32
    %36 = vector.broadcast %cst_17 : f32 to vector<8x128xf32>
    %37 = arith.subf %36, %25 : vector<8x128xf32>
    %cst_18 = arith.constant 0.000000e+00 : f32
    %38 = vector.broadcast %cst_18 : f32 to vector<8x128xf32>
    %39 = arith.minimumf %37, %38 : vector<8x128xf32>
    %40 = arith.subf %39, %32 : vector<8x128xf32>
    %cst_19 = arith.constant 0.000000e+00 : f32
    %41 = vector.broadcast %cst_19 : f32 to vector<8x128xf32>
    %42 = arith.cmpf oge, %25, %41 : vector<8x128xf32>
    %cst_20 = arith.constant 1.000000e+00 : f32
    %43 = vector.broadcast %cst_20 : f32 to vector<8x128xf32>
    %44 = arith.select %42, %43, %29 : vector<8x128xi1>, vector<8x128xf32>
    %cst_21 = arith.constant 1.000000e+00 : f32
    %45 = vector.broadcast %cst_21 : f32 to vector<8x128xf32>
    %46 = arith.addf %45, %29 : vector<8x128xf32>
    %47 = tpu.reciprocal %46 {approx = true} : vector<8x128xf32> -> vector<8x128xf32>
    %48 = arith.mulf %44, %47 : vector<8x128xf32>
    %cst_22 = arith.constant 9.99999974E-5 : f32
    %49 = vector.broadcast %cst_22 : f32 to vector<8x128xf32>
    %50 = arith.cmpf olt, %48, %49 : vector<8x128xf32>
    %cst_23 = arith.constant 0.999899983 : f32
    %51 = vector.broadcast %cst_23 : f32 to vector<8x128xf32>
    %52 = arith.cmpf ogt, %48, %51 : vector<8x128xf32>
    %cst_24 = arith.constant 9.99999974E-5 : f32
    %cst_25 = arith.constant 0.999899983 : f32
    %53 = vector.broadcast %cst_24 : f32 to vector<8x128xf32>
    %54 = arith.maximumf %53, %48 : vector<8x128xf32>
    %55 = vector.broadcast %cst_25 : f32 to vector<8x128xf32>
    %56 = arith.minimumf %55, %54 : vector<8x128xf32>
    %cst_26 = arith.constant -1.000050e-04 : f32
    %57 = vector.broadcast %cst_26 : f32 to vector<8x128xf32>
    %58 = arith.select %52, %57, %35 : vector<8x128xi1>, vector<8x128xf32>
    %cst_27 = arith.constant -9.21034049 : f32
    %59 = vector.broadcast %cst_27 : f32 to vector<8x128xf32>
    %60 = arith.select %50, %59, %58 : vector<8x128xi1>, vector<8x128xf32>
    %cst_28 = arith.constant -1.000050e-04 : f32
    %61 = vector.broadcast %cst_28 : f32 to vector<8x128xf32>
    %62 = arith.select %50, %61, %40 : vector<8x128xi1>, vector<8x128xf32>
    %cst_29 = arith.constant -9.21034049 : f32
    %63 = vector.broadcast %cst_29 : f32 to vector<8x128xf32>
    %64 = arith.select %52, %63, %62 : vector<8x128xi1>, vector<8x128xf32>
    %cst_30 = arith.constant 1.000000e+00 : f32
    %65 = vector.broadcast %cst_30 : f32 to vector<8x128xf32>
    %66 = arith.subf %65, %56 : vector<8x128xf32>
    %67 = arith.mulf %66, %66 : vector<8x128xf32>
    %68 = arith.mulf %60, %67 : vector<8x128xf32>
    %69 = arith.mulf %68, %7 : vector<8x128xf32>
    %70 = arith.mulf %56, %56 : vector<8x128xf32>
    %71 = arith.mulf %64, %70 : vector<8x128xf32>
    %72 = arith.mulf %71, %16 : vector<8x128xf32>
    %73 = arith.addf %69, %72 : vector<8x128xf32>
    %c0_31 = arith.constant 0 : index
    %c0_32 = arith.constant 0 : index
    %c0_33 = arith.constant 0 : index
    %c0_34 = arith.constant 0 : index
    %74 = vector.load %arg12[%c0_31, %c0_32, %c0_33, %c0_34] : memref<1x10x8x128xf32, #tpu.memory_space<vmem>>, vector<1x1x8x128xf32>
    %75 = vector.shape_cast %74 : vector<1x1x8x128xf32> to vector<8x128xf32>
    %76 = vector.shape_cast %73 : vector<8x128xf32> to vector<1x8x128xf32>
    %cst_35 = arith.constant dense<0.000000e+00> : vector<8x128xf32>
    %77 = vector.multi_reduction <add>, %76, %cst_35 [0] : vector<1x8x128xf32> to vector<8x128xf32>
    %78 = arith.addf %75, %77 : vector<8x128xf32>
    %c0_36 = arith.constant 0 : index
    %c0_37 = arith.constant 0 : index
    %c0_38 = arith.constant 0 : index
    %c0_39 = arith.constant 0 : index
    %79 = vector.load %arg12[%c0_36, %c0_37, %c0_38, %c0_39] : memref<1x10x8x128xf32, #tpu.memory_space<vmem>>, vector<1x1x8x128xf32>
    %80 = vector.shape_cast %79 : vector<1x1x8x128xf32> to vector<8x128xf32>
    %81 = vector.shape_cast %78 : vector<8x128xf32> to vector<1x1x8x128xf32>
    tpu.vector_store %arg12[%c0_36, %c0_37, %c0_38, %c0_39], %81 {strides = array<i32>} : memref<1x10x8x128xf32, #tpu.memory_space<vmem>>, vector<1x1x8x128xf32>,
    %c0_40 = arith.constant 0 : index
    %c0_41 = arith.constant 0 : index
    %82 = vector.load %arg7[%c0_40, %c0_41] : memref<8x128xf32, #tpu.memory_space<vmem>>, vector<8x128xf32>
    %83 = math.absf %82 : vector<8x128xf32>
    %cst_42 = arith.constant 0.000000e+00 : f32
    %84 = vector.broadcast %cst_42 : f32 to vector<8x128xf32>
    %85 = arith.subf %84, %83 : vector<8x128xf32>
    %86 = math.exp %85 : vector<8x128xf32>
    %cst_43 = arith.constant 1.000000e+00 : f32
    %87 = vector.broadcast %cst_43 : f32 to vector<8x128xf32>
    %88 = arith.addf %87, %86 : vector<8x128xf32>
    %89 = math.log %88 : vector<8x128xf32>
    %cst_44 = arith.constant 0.000000e+00 : f32
    %90 = vector.broadcast %cst_44 : f32 to vector<8x128xf32>
    %91 = arith.minimumf %82, %90 : vector<8x128xf32>
    %92 = arith.subf %91, %89 : vector<8x128xf32>
    %cst_45 = arith.constant 0.000000e+00 : f32
    %93 = vector.broadcast %cst_45 : f32 to vector<8x128xf32>
    %94 = arith.subf %93, %82 : vector<8x128xf32>
    %cst_46 = arith.constant 0.000000e+00 : f32
    %95 = vector.broadcast %cst_46 : f32 to vector<8x128xf32>
    %96 = arith.minimumf %94, %95 : vector<8x128xf32>
    %97 = arith.subf %96, %89 : vector<8x128xf32>
    %cst_47 = arith.constant 0.000000e+00 : f32
    %98 = vector.broadcast %cst_47 : f32 to vector<8x128xf32>
    %99 = arith.cmpf oge, %82, %98 : vector<8x128xf32>
    %cst_48 = arith.constant 1.000000e+00 : f32
    %100 = vector.broadcast %cst_48 : f32 to vector<8x128xf32>
    %101 = arith.select %99, %100, %86 : vector<8x128xi1>, vector<8x128xf32>
    %cst_49 = arith.constant 1.000000e+00 : f32
    %102 = vector.broadcast %cst_49 : f32 to vector<8x128xf32>
    %103 = arith.addf %102, %86 : vector<8x128xf32>
    %104 = tpu.reciprocal %103 {approx = true} : vector<8x128xf32> -> vector<8x128xf32>
    %105 = arith.mulf %101, %104 : vector<8x128xf32>
    %cst_50 = arith.constant 9.99999974E-5 : f32
    %106 = vector.broadcast %cst_50 : f32 to vector<8x128xf32>
    %107 = arith.cmpf olt, %105, %106 : vector<8x128xf32>
    %cst_51 = arith.constant 0.999899983 : f32
    %108 = vector.broadcast %cst_51 : f32 to vector<8x128xf32>
    %109 = arith.cmpf ogt, %105, %108 : vector<8x128xf32>
    %cst_52 = arith.constant 9.99999974E-5 : f32
    %cst_53 = arith.constant 0.999899983 : f32
    %110 = vector.broadcast %cst_52 : f32 to vector<8x128xf32>
    %111 = arith.maximumf %110, %105 : vector<8x128xf32>
    %112 = vector.broadcast %cst_53 : f32 to vector<8x128xf32>
    %113 = arith.minimumf %112, %111 : vector<8x128xf32>
    %cst_54 = arith.constant -1.000050e-04 : f32
    %114 = vector.broadcast %cst_54 : f32 to vector<8x128xf32>
    %115 = arith.select %109, %114, %92 : vector<8x128xi1>, vector<8x128xf32>
    %cst_55 = arith.constant -9.21034049 : f32
    %116 = vector.broadcast %cst_55 : f32 to vector<8x128xf32>
    %117 = arith.select %107, %116, %115 : vector<8x128xi1>, vector<8x128xf32>
    %cst_56 = arith.constant -1.000050e-04 : f32
    %118 = vector.broadcast %cst_56 : f32 to vector<8x128xf32>
    %119 = arith.select %107, %118, %97 : vector<8x128xi1>, vector<8x128xf32>
    %cst_57 = arith.constant -9.21034049 : f32
    %120 = vector.broadcast %cst_57 : f32 to vector<8x128xf32>
    %121 = arith.select %109, %120, %119 : vector<8x128xi1>, vector<8x128xf32>
    %cst_58 = arith.constant 1.000000e+00 : f32
    %122 = vector.broadcast %cst_58 : f32 to vector<8x128xf32>
    %123 = arith.subf %122, %113 : vector<8x128xf32>
    %124 = arith.mulf %123, %123 : vector<8x128xf32>
    %125 = arith.mulf %117, %124 : vector<8x128xf32>
    %126 = arith.mulf %125, %7 : vector<8x128xf32>
    %127 = arith.mulf %113, %113 : vector<8x128xf32>
    %128 = arith.mulf %121, %127 : vector<8x128xf32>
    %129 = arith.mulf %128, %16 : vector<8x128xf32>
    %130 = arith.addf %126, %129 : vector<8x128xf32>
    %c0_59 = arith.constant 0 : index
    %c1 = arith.constant 1 : index
    %c0_60 = arith.constant 0 : index
    %c0_61 = arith.constant 0 : index
    %131 = vector.load %arg12[%c0_59, %c1, %c0_60, %c0_61] : memref<1x10x8x128xf32, #tpu.memory_space<vmem>>, vector<1x1x8x128xf32>
    %132 = vector.shape_cast %131 : vector<1x1x8x128xf32> to vector<8x128xf32>
    %133 = vector.shape_cast %130 : vector<8x128xf32> to vector<1x8x128xf32>
    %cst_62 = arith.constant dense<0.000000e+00> : vector<8x128xf32>
    %134 = vector.multi_reduction <add>, %133, %cst_62 [0] : vector<1x8x128xf32> to vector<8x128xf32>
    %135 = arith.addf %132, %134 : vector<8x128xf32>
    %c0_63 = arith.constant 0 : index
    %c1_64 = arith.constant 1 : index
    %c0_65 = arith.constant 0 : index
    %c0_66 = arith.constant 0 : index
    %136 = vector.load %arg12[%c0_63, %c1_64, %c0_65, %c0_66] : memref<1x10x8x128xf32, #tpu.memory_space<vmem>>, vector<1x1x8x128xf32>
    %137 = vector.shape_cast %136 : vector<1x1x8x128xf32> to vector<8x128xf32>
    %138 = vector.shape_cast %135 : vector<8x128xf32> to vector<1x1x8x128xf32>
    tpu.vector_store %arg12[%c0_63, %c1_64, %c0_65, %c0_66], %138 {strides = array<i32>} : memref<1x10x8x128xf32, #tpu.memory_space<vmem>>, vector<1x1x8x128xf32>,
    %c0_67 = arith.constant 0 : index
    %c0_68 = arith.constant 0 : index
    %139 = vector.load %arg3[%c0_67, %c0_68] : memref<8x128xf32, #tpu.memory_space<vmem>>, vector<8x128xf32>
    %cst_69 = arith.constant 1.000000e+00 : f32
    %140 = vector.broadcast %cst_69 : f32 to vector<8x128xf32>
    %141 = arith.cmpf oeq, %139, %140 : vector<8x128xf32>
    %142 = arith.extui %141 : vector<8x128xi1> to vector<8x128xi32>
    %143 = arith.sitofp %142 : vector<8x128xi32> to vector<8x128xf32>
    %cst_70 = arith.constant 1.000000e+00 : f32
    %144 = vector.broadcast %cst_70 : f32 to vector<8x128xf32>
    %145 = arith.cmpf olt, %139, %144 : vector<8x128xf32>
    %146 = arith.extui %145 : vector<8x128xi1> to vector<8x128xi32>
    %147 = arith.sitofp %146 : vector<8x128xi32> to vector<8x128xf32>
    %cst_71 = arith.constant 1.000000e+00 : f32
    %148 = vector.broadcast %cst_71 : f32 to vector<8x128xf32>
    %149 = arith.subf %148, %139 : vector<8x128xf32>
    %150 = arith.mulf %149, %149 : vector<8x128xf32>
    %151 = arith.mulf %150, %150 : vector<8x128xf32>
    %152 = arith.mulf %151, %147 : vector<8x128xf32>
    %c0_72 = arith.constant 0 : index
    %c7 = arith.constant 7 : index
    %c0_73 = arith.constant 0 : index
    %c0_74 = arith.constant 0 : index
    %153 = vector.load %arg12[%c0_72, %c7, %c0_73, %c0_74] : memref<1x10x8x128xf32, #tpu.memory_space<vmem>>, vector<1x1x8x128xf32>
    %154 = vector.shape_cast %153 : vector<1x1x8x128xf32> to vector<8x128xf32>
    %155 = vector.shape_cast %143 : vector<8x128xf32> to vector<1x8x128xf32>
    %cst_75 = arith.constant dense<0.000000e+00> : vector<8x128xf32>
    %156 = vector.multi_reduction <add>, %155, %cst_75 [0] : vector<1x8x128xf32> to vector<8x128xf32>
    %157 = arith.addf %154, %156 : vector<8x128xf32>
    %c0_76 = arith.constant 0 : index
    %c7_77 = arith.constant 7 : index
    %c0_78 = arith.constant 0 : index
    %c0_79 = arith.constant 0 : index
    %158 = vector.load %arg12[%c0_76, %c7_77, %c0_78, %c0_79] : memref<1x10x8x128xf32, #tpu.memory_space<vmem>>, vector<1x1x8x128xf32>
    %159 = vector.shape_cast %158 : vector<1x1x8x128xf32> to vector<8x128xf32>
    %160 = vector.shape_cast %157 : vector<8x128xf32> to vector<1x1x8x128xf32>
    tpu.vector_store %arg12[%c0_76, %c7_77, %c0_78, %c0_79], %160 {strides = array<i32>} : memref<1x10x8x128xf32, #tpu.memory_space<vmem>>, vector<1x1x8x128xf32>,
    %c0_80 = arith.constant 0 : index
    %c0_81 = arith.constant 0 : index
    %161 = vector.load %arg8[%c0_80, %c0_81] : memref<8x128xf32, #tpu.memory_space<vmem>>, vector<8x128xf32>
    %162 = math.absf %161 : vector<8x128xf32>
    %cst_82 = arith.constant 0.000000e+00 : f32
    %163 = vector.broadcast %cst_82 : f32 to vector<8x128xf32>
    %164 = arith.subf %163, %162 : vector<8x128xf32>
    %165 = math.exp %164 : vector<8x128xf32>
    %cst_83 = arith.constant 1.000000e+00 : f32
    %166 = vector.broadcast %cst_83 : f32 to vector<8x128xf32>
    %167 = arith.addf %166, %165 : vector<8x128xf32>
    %168 = math.log %167 : vector<8x128xf32>
    %cst_84 = arith.constant 0.000000e+00 : f32
    %169 = vector.broadcast %cst_84 : f32 to vector<8x128xf32>
    %170 = arith.minimumf %161, %169 : vector<8x128xf32>
    %171 = arith.subf %170, %168 : vector<8x128xf32>
    %cst_85 = arith.constant 0.000000e+00 : f32
    %172 = vector.broadcast %cst_85 : f32 to vector<8x128xf32>
    %173 = arith.subf %172, %161 : vector<8x128xf32>
    %cst_86 = arith.constant 0.000000e+00 : f32
    %174 = vector.broadcast %cst_86 : f32 to vector<8x128xf32>
    %175 = arith.minimumf %173, %174 : vector<8x128xf32>
    %176 = arith.subf %175, %168 : vector<8x128xf32>
    %cst_87 = arith.constant 0.000000e+00 : f32
    %177 = vector.broadcast %cst_87 : f32 to vector<8x128xf32>
    %178 = arith.cmpf oge, %161, %177 : vector<8x128xf32>
    %cst_88 = arith.constant 1.000000e+00 : f32
    %179 = vector.broadcast %cst_88 : f32 to vector<8x128xf32>
    %180 = arith.select %178, %179, %165 : vector<8x128xi1>, vector<8x128xf32>
    %cst_89 = arith.constant 1.000000e+00 : f32
    %181 = vector.broadcast %cst_89 : f32 to vector<8x128xf32>
    %182 = arith.addf %181, %165 : vector<8x128xf32>
    %183 = tpu.reciprocal %182 {approx = true} : vector<8x128xf32> -> vector<8x128xf32>
    %184 = arith.mulf %180, %183 : vector<8x128xf32>
    %cst_90 = arith.constant 9.99999974E-5 : f32
    %185 = vector.broadcast %cst_90 : f32 to vector<8x128xf32>
    %186 = arith.cmpf olt, %184, %185 : vector<8x128xf32>
    %cst_91 = arith.constant 0.999899983 : f32
    %187 = vector.broadcast %cst_91 : f32 to vector<8x128xf32>
    %188 = arith.cmpf ogt, %184, %187 : vector<8x128xf32>
    %cst_92 = arith.constant 9.99999974E-5 : f32
    %cst_93 = arith.constant 0.999899983 : f32
    %189 = vector.broadcast %cst_92 : f32 to vector<8x128xf32>
    %190 = arith.maximumf %189, %184 : vector<8x128xf32>
    %191 = vector.broadcast %cst_93 : f32 to vector<8x128xf32>
    %192 = arith.minimumf %191, %190 : vector<8x128xf32>
    %cst_94 = arith.constant -1.000050e-04 : f32
    %193 = vector.broadcast %cst_94 : f32 to vector<8x128xf32>
    %194 = arith.select %188, %193, %171 : vector<8x128xi1>, vector<8x128xf32>
    %cst_95 = arith.constant -9.21034049 : f32
    %195 = vector.broadcast %cst_95 : f32 to vector<8x128xf32>
    %196 = arith.select %186, %195, %194 : vector<8x128xi1>, vector<8x128xf32>
    %cst_96 = arith.constant -1.000050e-04 : f32
    %197 = vector.broadcast %cst_96 : f32 to vector<8x128xf32>
    %198 = arith.select %186, %197, %176 : vector<8x128xi1>, vector<8x128xf32>
    %cst_97 = arith.constant -9.21034049 : f32
    %199 = vector.broadcast %cst_97 : f32 to vector<8x128xf32>
    %200 = arith.select %188, %199, %198 : vector<8x128xi1>, vector<8x128xf32>
    %cst_98 = arith.constant 1.000000e+00 : f32
    %201 = vector.broadcast %cst_98 : f32 to vector<8x128xf32>
    %202 = arith.subf %201, %192 : vector<8x128xf32>
    %203 = arith.mulf %202, %202 : vector<8x128xf32>
    %204 = arith.mulf %196, %203 : vector<8x128xf32>
    %205 = arith.mulf %204, %143 : vector<8x128xf32>
    %206 = arith.mulf %192, %192 : vector<8x128xf32>
    %207 = arith.mulf %200, %206 : vector<8x128xf32>
    %208 = arith.mulf %207, %152 : vector<8x128xf32>
    %209 = arith.addf %205, %208 : vector<8x128xf32>
    %c0_99 = arith.constant 0 : index
    %c2 = arith.constant 2 : index
    %c0_100 = arith.constant 0 : index
    %c0_101 = arith.constant 0 : index
    %210 = vector.load %arg12[%c0_99, %c2, %c0_100, %c0_101] : memref<1x10x8x128xf32, #tpu.memory_space<vmem>>, vector<1x1x8x128xf32>
    %211 = vector.shape_cast %210 : vector<1x1x8x128xf32> to vector<8x128xf32>
    %212 = vector.shape_cast %209 : vector<8x128xf32> to vector<1x8x128xf32>
    %cst_102 = arith.constant dense<0.000000e+00> : vector<8x128xf32>
    %213 = vector.multi_reduction <add>, %212, %cst_102 [0] : vector<1x8x128xf32> to vector<8x128xf32>
    %214 = arith.addf %211, %213 : vector<8x128xf32>
    %c0_103 = arith.constant 0 : index
    %c2_104 = arith.constant 2 : index
    %c0_105 = arith.constant 0 : index
    %c0_106 = arith.constant 0 : index
    %215 = vector.load %arg12[%c0_103, %c2_104, %c0_105, %c0_106] : memref<1x10x8x128xf32, #tpu.memory_space<vmem>>, vector<1x1x8x128xf32>
    %216 = vector.shape_cast %215 : vector<1x1x8x128xf32> to vector<8x128xf32>
    %217 = vector.shape_cast %214 : vector<8x128xf32> to vector<1x1x8x128xf32>
    tpu.vector_store %arg12[%c0_103, %c2_104, %c0_105, %c0_106], %217 {strides = array<i32>} : memref<1x10x8x128xf32, #tpu.memory_space<vmem>>, vector<1x1x8x128xf32>,
    %c0_107 = arith.constant 0 : index
    %c0_108 = arith.constant 0 : index
    %218 = vector.load %arg9[%c0_107, %c0_108] : memref<8x128xf32, #tpu.memory_space<vmem>>, vector<8x128xf32>
    %219 = math.absf %218 : vector<8x128xf32>
    %cst_109 = arith.constant 0.000000e+00 : f32
    %220 = vector.broadcast %cst_109 : f32 to vector<8x128xf32>
    %221 = arith.subf %220, %219 : vector<8x128xf32>
    %222 = math.exp %221 : vector<8x128xf32>
    %cst_110 = arith.constant 1.000000e+00 : f32
    %223 = vector.broadcast %cst_110 : f32 to vector<8x128xf32>
    %224 = arith.addf %223, %222 : vector<8x128xf32>
    %225 = math.log %224 : vector<8x128xf32>
    %cst_111 = arith.constant 0.000000e+00 : f32
    %226 = vector.broadcast %cst_111 : f32 to vector<8x128xf32>
    %227 = arith.minimumf %218, %226 : vector<8x128xf32>
    %228 = arith.subf %227, %225 : vector<8x128xf32>
    %cst_112 = arith.constant 0.000000e+00 : f32
    %229 = vector.broadcast %cst_112 : f32 to vector<8x128xf32>
    %230 = arith.subf %229, %218 : vector<8x128xf32>
    %cst_113 = arith.constant 0.000000e+00 : f32
    %231 = vector.broadcast %cst_113 : f32 to vector<8x128xf32>
    %232 = arith.minimumf %230, %231 : vector<8x128xf32>
    %233 = arith.subf %232, %225 : vector<8x128xf32>
    %cst_114 = arith.constant 0.000000e+00 : f32
    %234 = vector.broadcast %cst_114 : f32 to vector<8x128xf32>
    %235 = arith.cmpf oge, %218, %234 : vector<8x128xf32>
    %cst_115 = arith.constant 1.000000e+00 : f32
    %236 = vector.broadcast %cst_115 : f32 to vector<8x128xf32>
    %237 = arith.select %235, %236, %222 : vector<8x128xi1>, vector<8x128xf32>
    %cst_116 = arith.constant 1.000000e+00 : f32
    %238 = vector.broadcast %cst_116 : f32 to vector<8x128xf32>
    %239 = arith.addf %238, %222 : vector<8x128xf32>
    %240 = tpu.reciprocal %239 {approx = true} : vector<8x128xf32> -> vector<8x128xf32>
    %241 = arith.mulf %237, %240 : vector<8x128xf32>
    %cst_117 = arith.constant 9.99999974E-5 : f32
    %242 = vector.broadcast %cst_117 : f32 to vector<8x128xf32>
    %243 = arith.cmpf olt, %241, %242 : vector<8x128xf32>
    %cst_118 = arith.constant 0.999899983 : f32
    %244 = vector.broadcast %cst_118 : f32 to vector<8x128xf32>
    %245 = arith.cmpf ogt, %241, %244 : vector<8x128xf32>
    %cst_119 = arith.constant 9.99999974E-5 : f32
    %cst_120 = arith.constant 0.999899983 : f32
    %246 = vector.broadcast %cst_119 : f32 to vector<8x128xf32>
    %247 = arith.maximumf %246, %241 : vector<8x128xf32>
    %248 = vector.broadcast %cst_120 : f32 to vector<8x128xf32>
    %249 = arith.minimumf %248, %247 : vector<8x128xf32>
    %cst_121 = arith.constant -1.000050e-04 : f32
    %250 = vector.broadcast %cst_121 : f32 to vector<8x128xf32>
    %251 = arith.select %245, %250, %228 : vector<8x128xi1>, vector<8x128xf32>
    %cst_122 = arith.constant -9.21034049 : f32
    %252 = vector.broadcast %cst_122 : f32 to vector<8x128xf32>
    %253 = arith.select %243, %252, %251 : vector<8x128xi1>, vector<8x128xf32>
    %cst_123 = arith.constant -1.000050e-04 : f32
    %254 = vector.broadcast %cst_123 : f32 to vector<8x128xf32>
    %255 = arith.select %243, %254, %233 : vector<8x128xi1>, vector<8x128xf32>
    %cst_124 = arith.constant -9.21034049 : f32
    %256 = vector.broadcast %cst_124 : f32 to vector<8x128xf32>
    %257 = arith.select %245, %256, %255 : vector<8x128xi1>, vector<8x128xf32>
    %cst_125 = arith.constant 1.000000e+00 : f32
    %258 = vector.broadcast %cst_125 : f32 to vector<8x128xf32>
    %259 = arith.subf %258, %249 : vector<8x128xf32>
    %260 = arith.mulf %259, %259 : vector<8x128xf32>
    %261 = arith.mulf %253, %260 : vector<8x128xf32>
    %262 = arith.mulf %261, %143 : vector<8x128xf32>
    %263 = arith.mulf %249, %249 : vector<8x128xf32>
    %264 = arith.mulf %257, %263 : vector<8x128xf32>
    %265 = arith.mulf %264, %152 : vector<8x128xf32>
    %266 = arith.addf %262, %265 : vector<8x128xf32>
    %c0_126 = arith.constant 0 : index
    %c3 = arith.constant 3 : index
    %c0_127 = arith.constant 0 : index
    %c0_128 = arith.constant 0 : index
    %267 = vector.load %arg12[%c0_126, %c3, %c0_127, %c0_128] : memref<1x10x8x128xf32, #tpu.memory_space<vmem>>, vector<1x1x8x128xf32>
    %268 = vector.shape_cast %267 : vector<1x1x8x128xf32> to vector<8x128xf32>
    %269 = vector.shape_cast %266 : vector<8x128xf32> to vector<1x8x128xf32>
    %cst_129 = arith.constant dense<0.000000e+00> : vector<8x128xf32>
    %270 = vector.multi_reduction <add>, %269, %cst_129 [0] : vector<1x8x128xf32> to vector<8x128xf32>
    %271 = arith.addf %268, %270 : vector<8x128xf32>
    %c0_130 = arith.constant 0 : index
    %c3_131 = arith.constant 3 : index
    %c0_132 = arith.constant 0 : index
    %c0_133 = arith.constant 0 : index
    %272 = vector.load %arg12[%c0_130, %c3_131, %c0_132, %c0_133] : memref<1x10x8x128xf32, #tpu.memory_space<vmem>>, vector<1x1x8x128xf32>
    %273 = vector.shape_cast %272 : vector<1x1x8x128xf32> to vector<8x128xf32>
    %274 = vector.shape_cast %271 : vector<8x128xf32> to vector<1x1x8x128xf32>
    tpu.vector_store %arg12[%c0_130, %c3_131, %c0_132, %c0_133], %274 {strides = array<i32>} : memref<1x10x8x128xf32, #tpu.memory_space<vmem>>, vector<1x1x8x128xf32>,
    %c0_134 = arith.constant 0 : index
    %c0_135 = arith.constant 0 : index
    %275 = vector.load %arg4[%c0_134, %c0_135] : memref<8x128xf32, #tpu.memory_space<vmem>>, vector<8x128xf32>
    %cst_136 = arith.constant 1.000000e+00 : f32
    %276 = vector.broadcast %cst_136 : f32 to vector<8x128xf32>
    %277 = arith.cmpf oeq, %275, %276 : vector<8x128xf32>
    %278 = arith.extui %277 : vector<8x128xi1> to vector<8x128xi32>
    %279 = arith.sitofp %278 : vector<8x128xi32> to vector<8x128xf32>
    %cst_137 = arith.constant 1.000000e+00 : f32
    %280 = vector.broadcast %cst_137 : f32 to vector<8x128xf32>
    %281 = arith.cmpf olt, %275, %280 : vector<8x128xf32>
    %282 = arith.extui %281 : vector<8x128xi1> to vector<8x128xi32>
    %283 = arith.sitofp %282 : vector<8x128xi32> to vector<8x128xf32>
    %cst_138 = arith.constant 1.000000e+00 : f32
    %284 = vector.broadcast %cst_138 : f32 to vector<8x128xf32>
    %285 = arith.subf %284, %275 : vector<8x128xf32>
    %286 = arith.mulf %285, %285 : vector<8x128xf32>
    %287 = arith.mulf %286, %286 : vector<8x128xf32>
    %288 = arith.mulf %287, %283 : vector<8x128xf32>
    %c0_139 = arith.constant 0 : index
    %c8 = arith.constant 8 : index
    %c0_140 = arith.constant 0 : index
    %c0_141 = arith.constant 0 : index
    %289 = vector.load %arg12[%c0_139, %c8, %c0_140, %c0_141] : memref<1x10x8x128xf32, #tpu.memory_space<vmem>>, vector<1x1x8x128xf32>
    %290 = vector.shape_cast %289 : vector<1x1x8x128xf32> to vector<8x128xf32>
    %291 = vector.shape_cast %279 : vector<8x128xf32> to vector<1x8x128xf32>
    %cst_142 = arith.constant dense<0.000000e+00> : vector<8x128xf32>
    %292 = vector.multi_reduction <add>, %291, %cst_142 [0] : vector<1x8x128xf32> to vector<8x128xf32>
    %293 = arith.addf %290, %292 : vector<8x128xf32>
    %c0_143 = arith.constant 0 : index
    %c8_144 = arith.constant 8 : index
    %c0_145 = arith.constant 0 : index
    %c0_146 = arith.constant 0 : index
    %294 = vector.load %arg12[%c0_143, %c8_144, %c0_145, %c0_146] : memref<1x10x8x128xf32, #tpu.memory_space<vmem>>, vector<1x1x8x128xf32>
    %295 = vector.shape_cast %294 : vector<1x1x8x128xf32> to vector<8x128xf32>
    %296 = vector.shape_cast %293 : vector<8x128xf32> to vector<1x1x8x128xf32>
    tpu.vector_store %arg12[%c0_143, %c8_144, %c0_145, %c0_146], %296 {strides = array<i32>} : memref<1x10x8x128xf32, #tpu.memory_space<vmem>>, vector<1x1x8x128xf32>,
    %c0_147 = arith.constant 0 : index
    %c0_148 = arith.constant 0 : index
    %297 = vector.load %arg10[%c0_147, %c0_148] : memref<8x128xf32, #tpu.memory_space<vmem>>, vector<8x128xf32>
    %298 = math.log %297 : vector<8x128xf32>
    %cst_149 = arith.constant 1.000000e+00 : f32
    %299 = vector.broadcast %cst_149 : f32 to vector<8x128xf32>
    %300 = arith.subf %299, %297 : vector<8x128xf32>
    %301 = math.log %300 : vector<8x128xf32>
    %cst_150 = arith.constant 1.000000e+00 : f32
    %302 = vector.broadcast %cst_150 : f32 to vector<8x128xf32>
    %303 = arith.subf %302, %297 : vector<8x128xf32>
    %304 = arith.mulf %303, %303 : vector<8x128xf32>
    %305 = arith.mulf %298, %304 : vector<8x128xf32>
    %306 = arith.mulf %305, %279 : vector<8x128xf32>
    %307 = arith.mulf %297, %297 : vector<8x128xf32>
    %308 = arith.mulf %301, %307 : vector<8x128xf32>
    %309 = arith.mulf %308, %288 : vector<8x128xf32>
    %310 = arith.addf %306, %309 : vector<8x128xf32>
    %c0_151 = arith.constant 0 : index
    %c4 = arith.constant 4 : index
    %c0_152 = arith.constant 0 : index
    %c0_153 = arith.constant 0 : index
    %311 = vector.load %arg12[%c0_151, %c4, %c0_152, %c0_153] : memref<1x10x8x128xf32, #tpu.memory_space<vmem>>, vector<1x1x8x128xf32>
    %312 = vector.shape_cast %311 : vector<1x1x8x128xf32> to vector<8x128xf32>
    %313 = vector.shape_cast %310 : vector<8x128xf32> to vector<1x8x128xf32>
    %cst_154 = arith.constant dense<0.000000e+00> : vector<8x128xf32>
    %314 = vector.multi_reduction <add>, %313, %cst_154 [0] : vector<1x8x128xf32> to vector<8x128xf32>
    %315 = arith.addf %312, %314 : vector<8x128xf32>
    %c0_155 = arith.constant 0 : index
    %c4_156 = arith.constant 4 : index
    %c0_157 = arith.constant 0 : index
    %c0_158 = arith.constant 0 : index
    %316 = vector.load %arg12[%c0_155, %c4_156, %c0_157, %c0_158] : memref<1x10x8x128xf32, #tpu.memory_space<vmem>>, vector<1x1x8x128xf32>
    %317 = vector.shape_cast %316 : vector<1x1x8x128xf32> to vector<8x128xf32>
    %318 = vector.shape_cast %315 : vector<8x128xf32> to vector<1x1x8x128xf32>
    tpu.vector_store %arg12[%c0_155, %c4_156, %c0_157, %c0_158], %318 {strides = array<i32>} : memref<1x10x8x128xf32, #tpu.memory_space<vmem>>, vector<1x1x8x128xf32>,
    %c0_159 = arith.constant 0 : index
    %c0_160 = arith.constant 0 : index
    %319 = vector.load %arg5[%c0_159, %c0_160] : memref<8x128xf32, #tpu.memory_space<vmem>>, vector<8x128xf32>
    %cst_161 = arith.constant 1.000000e+00 : f32
    %320 = vector.broadcast %cst_161 : f32 to vector<8x128xf32>
    %321 = arith.cmpf oeq, %319, %320 : vector<8x128xf32>
    %322 = arith.extui %321 : vector<8x128xi1> to vector<8x128xi32>
    %323 = arith.sitofp %322 : vector<8x128xi32> to vector<8x128xf32>
    %cst_162 = arith.constant 1.000000e+00 : f32
    %324 = vector.broadcast %cst_162 : f32 to vector<8x128xf32>
    %325 = arith.cmpf olt, %319, %324 : vector<8x128xf32>
    %326 = arith.extui %325 : vector<8x128xi1> to vector<8x128xi32>
    %327 = arith.sitofp %326 : vector<8x128xi32> to vector<8x128xf32>
    %cst_163 = arith.constant 1.000000e+00 : f32
    %328 = vector.broadcast %cst_163 : f32 to vector<8x128xf32>
    %329 = arith.subf %328, %319 : vector<8x128xf32>
    %330 = arith.mulf %329, %329 : vector<8x128xf32>
    %331 = arith.mulf %330, %330 : vector<8x128xf32>
    %332 = arith.mulf %331, %327 : vector<8x128xf32>
    %c0_164 = arith.constant 0 : index
    %c9 = arith.constant 9 : index
    %c0_165 = arith.constant 0 : index
    %c0_166 = arith.constant 0 : index
    %333 = vector.load %arg12[%c0_164, %c9, %c0_165, %c0_166] : memref<1x10x8x128xf32, #tpu.memory_space<vmem>>, vector<1x1x8x128xf32>
    %334 = vector.shape_cast %333 : vector<1x1x8x128xf32> to vector<8x128xf32>
    %335 = vector.shape_cast %323 : vector<8x128xf32> to vector<1x8x128xf32>
    %cst_167 = arith.constant dense<0.000000e+00> : vector<8x128xf32>
    %336 = vector.multi_reduction <add>, %335, %cst_167 [0] : vector<1x8x128xf32> to vector<8x128xf32>
    %337 = arith.addf %334, %336 : vector<8x128xf32>
    %c0_168 = arith.constant 0 : index
    %c9_169 = arith.constant 9 : index
    %c0_170 = arith.constant 0 : index
    %c0_171 = arith.constant 0 : index
    %338 = vector.load %arg12[%c0_168, %c9_169, %c0_170, %c0_171] : memref<1x10x8x128xf32, #tpu.memory_space<vmem>>, vector<1x1x8x128xf32>
    %339 = vector.shape_cast %338 : vector<1x1x8x128xf32> to vector<8x128xf32>
    %340 = vector.shape_cast %337 : vector<8x128xf32> to vector<1x1x8x128xf32>
    tpu.vector_store %arg12[%c0_168, %c9_169, %c0_170, %c0_171], %340 {strides = array<i32>} : memref<1x10x8x128xf32, #tpu.memory_space<vmem>>, vector<1x1x8x128xf32>,
    %c0_172 = arith.constant 0 : index
    %c0_173 = arith.constant 0 : index
    %341 = vector.load %arg11[%c0_172, %c0_173] : memref<8x128xf32, #tpu.memory_space<vmem>>, vector<8x128xf32>
    %342 = math.log %341 : vector<8x128xf32>
    %cst_174 = arith.constant 1.000000e+00 : f32
    %343 = vector.broadcast %cst_174 : f32 to vector<8x128xf32>
    %344 = arith.subf %343, %341 : vector<8x128xf32>
    %345 = math.log %344 : vector<8x128xf32>
    %cst_175 = arith.constant 1.000000e+00 : f32
    %346 = vector.broadcast %cst_175 : f32 to vector<8x128xf32>
    %347 = arith.subf %346, %341 : vector<8x128xf32>
    %348 = arith.mulf %347, %347 : vector<8x128xf32>
    %349 = arith.mulf %342, %348 : vector<8x128xf32>
    %350 = arith.mulf %349, %323 : vector<8x128xf32>
    %351 = arith.mulf %341, %341 : vector<8x128xf32>
    %352 = arith.mulf %345, %351 : vector<8x128xf32>
    %353 = arith.mulf %352, %332 : vector<8x128xf32>
    %354 = arith.addf %350, %353 : vector<8x128xf32>
    %c0_176 = arith.constant 0 : index
    %c5 = arith.constant 5 : index
    %c0_177 = arith.constant 0 : index
    %c0_178 = arith.constant 0 : index
    %355 = vector.load %arg12[%c0_176, %c5, %c0_177, %c0_178] : memref<1x10x8x128xf32, #tpu.memory_space<vmem>>, vector<1x1x8x128xf32>
    %356 = vector.shape_cast %355 : vector<1x1x8x128xf32> to vector<8x128xf32>
    %357 = vector.shape_cast %354 : vector<8x128xf32> to vector<1x8x128xf32>
    %cst_179 = arith.constant dense<0.000000e+00> : vector<8x128xf32>
    %358 = vector.multi_reduction <add>, %357, %cst_179 [0] : vector<1x8x128xf32> to vector<8x128xf32>
    %359 = arith.addf %356, %358 : vector<8x128xf32>
    %c0_180 = arith.constant 0 : index
    %c5_181 = arith.constant 5 : index
    %c0_182 = arith.constant 0 : index
    %c0_183 = arith.constant 0 : index
    %360 = vector.load %arg12[%c0_180, %c5_181, %c0_182, %c0_183] : memref<1x10x8x128xf32, #tpu.memory_space<vmem>>, vector<1x1x8x128xf32>
    %361 = vector.shape_cast %360 : vector<1x1x8x128xf32> to vector<8x128xf32>
    %362 = vector.shape_cast %359 : vector<8x128xf32> to vector<1x1x8x128xf32>
    tpu.vector_store %arg12[%c0_180, %c5_181, %c0_182, %c0_183], %362 {strides = array<i32>} : memref<1x10x8x128xf32, #tpu.memory_space<vmem>>, vector<1x1x8x128xf32>,
    return
  }
  func.func @transform_0(%arg0: i32, %arg1: i32) -> (i32, i32) {
    %c1_i32 = arith.constant 1 : i32
    %0 = arith.muli %arg0, %c1_i32 : i32
    %1 = arith.addi %0, %arg1 : i32
    %c0_i32 = arith.constant 0 : i32
    %c0_i32_0 = arith.constant 0 : i32
    return %1, %c0_i32 : i32, i32
  }
  func.func @transform_1(%arg0: i32, %arg1: i32) -> (i32, i32) {
    %c1_i32 = arith.constant 1 : i32
    %0 = arith.muli %arg0, %c1_i32 : i32
    %1 = arith.addi %0, %arg1 : i32
    %c0_i32 = arith.constant 0 : i32
    %c0_i32_0 = arith.constant 0 : i32
    return %1, %c0_i32 : i32, i32
  }
  func.func @transform_2(%arg0: i32, %arg1: i32) -> (i32, i32) {
    %c1_i32 = arith.constant 1 : i32
    %0 = arith.muli %arg0, %c1_i32 : i32
    %1 = arith.addi %0, %arg1 : i32
    %c0_i32 = arith.constant 0 : i32
    %c0_i32_0 = arith.constant 0 : i32
    return %1, %c0_i32 : i32, i32
  }
  func.func @transform_3(%arg0: i32, %arg1: i32) -> (i32, i32) {
    %c1_i32 = arith.constant 1 : i32
    %0 = arith.muli %arg0, %c1_i32 : i32
    %1 = arith.addi %0, %arg1 : i32
    %c0_i32 = arith.constant 0 : i32
    %c0_i32_0 = arith.constant 0 : i32
    return %1, %c0_i32 : i32, i32
  }
  func.func @transform_4(%arg0: i32, %arg1: i32) -> (i32, i32) {
    %c1_i32 = arith.constant 1 : i32
    %0 = arith.muli %arg0, %c1_i32 : i32
    %1 = arith.addi %0, %arg1 : i32
    %c0_i32 = arith.constant 0 : i32
    %c0_i32_0 = arith.constant 0 : i32
    return %1, %c0_i32 : i32, i32
  }
  func.func @transform_5(%arg0: i32, %arg1: i32) -> (i32, i32) {
    %c1_i32 = arith.constant 1 : i32
    %0 = arith.muli %arg0, %c1_i32 : i32
    %1 = arith.addi %0, %arg1 : i32
    %c0_i32 = arith.constant 0 : i32
    %c0_i32_0 = arith.constant 0 : i32
    return %1, %c0_i32 : i32, i32
  }
  func.func @transform_6(%arg0: i32, %arg1: i32) -> (i32, i32) {
    %c1_i32 = arith.constant 1 : i32
    %0 = arith.muli %arg0, %c1_i32 : i32
    %1 = arith.addi %0, %arg1 : i32
    %c0_i32 = arith.constant 0 : i32
    %c0_i32_0 = arith.constant 0 : i32
    return %1, %c0_i32 : i32, i32
  }
  func.func @transform_7(%arg0: i32, %arg1: i32) -> (i32, i32) {
    %c1_i32 = arith.constant 1 : i32
    %0 = arith.muli %arg0, %c1_i32 : i32
    %1 = arith.addi %0, %arg1 : i32
    %c0_i32 = arith.constant 0 : i32
    %c0_i32_0 = arith.constant 0 : i32
    return %1, %c0_i32 : i32, i32
  }
  func.func @transform_8(%arg0: i32, %arg1: i32) -> (i32, i32) {
    %c1_i32 = arith.constant 1 : i32
    %0 = arith.muli %arg0, %c1_i32 : i32
    %1 = arith.addi %0, %arg1 : i32
    %c0_i32 = arith.constant 0 : i32
    %c0_i32_0 = arith.constant 0 : i32
    return %1, %c0_i32 : i32, i32
  }
  func.func @transform_9(%arg0: i32, %arg1: i32) -> (i32, i32) {
    %c1_i32 = arith.constant 1 : i32
    %0 = arith.muli %arg0, %c1_i32 : i32
    %1 = arith.addi %0, %arg1 : i32
    %c0_i32 = arith.constant 0 : i32
    %c0_i32_0 = arith.constant 0 : i32
    return %1, %c0_i32 : i32, i32
  }
  func.func @transform_10(%arg0: i32, %arg1: i32) -> (i32, i32, i32, i32) {
    %c0_i32 = arith.constant 0 : i32
    %c0_i32_0 = arith.constant 0 : i32
    %c0_i32_1 = arith.constant 0 : i32
    %c0_i32_2 = arith.constant 0 : i32
    return %arg0, %c0_i32, %c0_i32_0, %c0_i32_1 : i32, i32, i32, i32
  }
}

</mosaic_0001>

<llo_original>
// kernel: tpu_custom_call.1
$region0: #{tpu_custom_call.1}
  #allocation0 [shape = 'u32[]', space=smem, size = 0x4, offset = 0x4, fixed_abs, tag = 'smem constant byte address 0x4 - core index']
  #allocation1 [shape = 'u32[72,128]{1,0:T(1,128)}', space=vmem, size = 0x9000, scoped, tag = 'internal scratch']
  %s0 = inlined_call_operand.hbm [shape: f32[16,128], index: 0, kind: input, shape index: {}]
  %s1 = inlined_call_operand.hbm [shape: f32[16,128], index: 1, kind: input, shape index: {}]
  %s2 = inlined_call_operand.hbm [shape: f32[16,128], index: 2, kind: input, shape index: {}]
  %s3 = inlined_call_operand.hbm [shape: f32[16,128], index: 3, kind: input, shape index: {}]
  %s4 = inlined_call_operand.hbm [shape: f32[16,128], index: 4, kind: input, shape index: {}]
  %s5 = inlined_call_operand.hbm [shape: f32[16,128], index: 5, kind: input, shape index: {}]
  %s6 = inlined_call_operand.hbm [shape: f32[16,128], index: 6, kind: input, shape index: {}]
  %s7 = inlined_call_operand.hbm [shape: f32[16,128], index: 7, kind: input, shape index: {}]
  %s8 = inlined_call_operand.hbm [shape: f32[16,128], index: 8, kind: input, shape index: {}]
  %s9 = inlined_call_operand.hbm [shape: f32[16,128], index: 9, kind: input, shape index: {}]
  %s10 = inlined_call_operand.hbm [shape: f32[2,10,8,128], index: 10, kind: output, shape index: {}]
  %s11 = sld [smem:[#allocation0]]
  $region117: #{tpu_custom_call.1} parent=0
    _
  %s13 = ssub.s32 1, %s11
  %s14 = scalar_select 0, %s13, %s11
  $region1: #{tpu_custom_call.1} parent=0
    #allocation2 [shape = 'u8[8192]{0}', space=vmem, size = 0x2000, scoped, tag = 'input window, operand 0']
    #allocation3 [shape = 's32[2]{0}', space=sflag, size = 0x8, scoped, tag = 'scoped memory for tpu_custom_call.1']
    #allocation4 [shape = 's32[2]{0}', space=sflag, size = 0x8, scoped, tag = 'scoped memory for tpu_custom_call.1']
    #allocation5 [shape = 'u8[8192]{0}', space=vmem, size = 0x2000, scoped, tag = 'input window, operand 1']
    #allocation6 [shape = 's32[2]{0}', space=sflag, size = 0x8, scoped, tag = 'scoped memory for tpu_custom_call.1']
    #allocation7 [shape = 'u8[8192]{0}', space=vmem, size = 0x2000, scoped, tag = 'input window, operand 2']
    #allocation8 [shape = 'u8[8192]{0}', space=vmem, size = 0x2000, scoped, tag = 'input window, operand 3']
    #allocation9 [shape = 's32[2]{0}', space=sflag, size = 0x8, scoped, tag = 'scoped memory for tpu_custom_call.1']
    #allocation10 [shape = 'u8[8192]{0}', space=vmem, size = 0x2000, scoped, tag = 'input window, operand 4']
    #allocation11 [shape = 'u8[8192]{0}', space=vmem, size = 0x2000, scoped, tag = 'input window, operand 5']
    #allocation12 [shape = 's32[2]{0}', space=sflag, size = 0x8, scoped, tag = 'scoped memory for tpu_custom_call.1']
    #allocation13 [shape = 'u8[8192]{0}', space=vmem, size = 0x2000, scoped, tag = 'input window, operand 6']
    #allocation14 [shape = 'u8[8192]{0}', space=vmem, size = 0x2000, scoped, tag = 'input window, operand 7']
    #allocation15 [shape = 's32[2]{0}', space=sflag, size = 0x8, scoped, tag = 'scoped memory for tpu_custom_call.1']
    #allocation16 [shape = 'u8[8192]{0}', space=vmem, size = 0x2000, scoped, tag = 'input window, operand 8']
    #allocation17 [shape = 'u8[8192]{0}', space=vmem, size = 0x2000, scoped, tag = 'input window, operand 9']
    #allocation18 [shape = 's32[2]{0}', space=sflag, size = 0x8, scoped, tag = 'scoped memory for tpu_custom_call.1']
    #allocation19 [shape = 'u8[81920]{0}', space=vmem, size = 0x14000, scoped, tag = 'output window, operand 0']
    %15 = vsyncpa [#allocation3], 0
    %s16 = scalar_lea.sflag [#allocation3], 1
    %17 = vsyncpa %s16, 0
    %18 = vsyncpa [#allocation6], 0
    %s19 = scalar_lea.sflag [#allocation6], 1
    %20 = vsyncpa %s19, 0
    %21 = vsyncpa [#allocation9], 0
    %s22 = scalar_lea.sflag [#allocation9], 1
    %23 = vsyncpa %s22, 0
    %24 = vsyncpa [#allocation12], 0
    %s25 = scalar_lea.sflag [#allocation12], 1
    %26 = vsyncpa %s25, 0
    %27 = vsyncpa [#allocation15], 0
    %s28 = scalar_lea.sflag [#allocation15], 1
    %29 = vsyncpa %s28, 0
    %30 = vsyncpa [#allocation18], 0
    %s31 = scalar_lea.sflag [#allocation18], 1
    %32 = vsyncpa %s31, 0
    %33 = vsyncpa [#allocation4], 0
    %s34 = scalar_lea.sflag [#allocation4], 1
    %35 = vsyncpa %s34, 0
    loop: start=0, step=1, limit=4
    $region2: #{tpu_custom_call.1} parent=1 // loop_pre_header
      _
    $region3: #{tpu_custom_call.1} parent=1 // loop_header
      %s37 = sphi 0, %s41
      %p38 = scmp.ge.s32.totalorder %s37, 4
      %s44 = sphi 0, %s56
      %s45 = sphi 0, %s52
      %s46 = sphi 0, %s44
      %s47 = sphi 0, %s45
      %s48 = sphi 0, %s46
      %s49 = sphi 0, %s47
      %s61 = sphi 0, %s63
      %s64 = sphi 0, %s61
      %s65 = sphi 0, %s64
      %s81 = sphi 0, %s65
      %s89 = sphi 0, %s91
      %s92 = sphi 0, %s89
      %s93 = sphi 0, %s92
      %s109 = sphi 0, %s93
      %s117 = sphi 0, %s119
      %s120 = sphi 0, %s117
      %s121 = sphi 0, %s120
      %s137 = sphi 0, %s121
      %s145 = sphi 0, %s147
      %s148 = sphi 0, %s145
      %s149 = sphi 0, %s148
      %s165 = sphi 0, %s149
      %s173 = sphi 0, %s175
      %s176 = sphi 0, %s173
      %s177 = sphi 0, %s176
      %s193 = sphi 0, %s177
      %s201 = sphi 0, %s203
      %s204 = sphi 0, %s201
      %s205 = sphi 0, %s204
      %s221 = sphi 0, %s205
      %s229 = sphi 0, %s231
      %s232 = sphi 0, %s229
      %s233 = sphi 0, %s232
      %s249 = sphi 0, %s233
      %s257 = sphi 0, %s259
      %s260 = sphi 0, %s257
      %s261 = sphi 0, %s260
      %s277 = sphi 0, %s261
      %s285 = sphi 0, %s287
      %s288 = sphi 0, %s285
      %s289 = sphi 0, %s288
      %s305 = sphi 0, %s289
      %s313 = sphi 0, %s315
      %s316 = sphi 0, %s313
      %s317 = sphi 0, %s316
      %s333 = sphi 0, %s317
      %s339 = sphi 0, %s341
      %s342 = sphi 0, %s339
      %s343 = sphi 0, %s342
      %s359 = sphi 0, %s343
    $region4: #{tpu_custom_call.1} parent=1 // loop_header_branch
      %40 = sbr.rel (%p38) target = $region8
    $region5: #{tpu_custom_call.1} parent=1 // loop_body
      %s42 = ssub.s32 %s37, 1
      %s43 = ssub.s32 %s37, 2
      %s50 = sadd.s32 1, %s45
      %p51 = scmp.ge.s32.totalorder %s50, 1
      %s52 = scalar_select %p51, 0, %s50
      %s53 = sadd.s32 1, %s44
      %s54 = scalar_select %p51, %s53, %s44
      %p55 = scmp.ge.s32.totalorder %s54, 2
      %s56 = scalar_select %p55, 0, %s54
      %s57 = sadd.s32 %s44, %s45
      %s58 = sadd.s32 %s56, %s52
      %s59 = ssub.s32 %s57, %s58
      %p60 = scmp.eq.s32.totalorder %s59, 0
      %s62 = sadd.s32 %s61, 1
      %s63 = scalar_select %p60, %s61, %s62
      %p66 = pneg %p60
      %p67 = scmp.eq.s32.totalorder %s37, 1
      %p68 = por %p66, %p67
      %p69 = scmp.ne.s32.totalorder %s61, %s64
      %p70 = scmp.eq.s32.totalorder %s37, 0
      %p71 = por %p69, %p70
      %p72 = scmp.ne.s32.totalorder %s61, %s64
      %p73 = scmp.eq.s32.totalorder %s42, 1
      %p74 = por %p72, %p73
      %p75 = scmp.ne.s32.totalorder %s64, %s65
      %p76 = scmp.eq.s32.totalorder %s42, 0
      %p77 = por %p75, %p76
      %p78 = scmp.ne.s32.totalorder %s64, %s65
      %p79 = scmp.eq.s32.totalorder %s43, 1
      %p80 = por %p78, %p79
      %p82 = scmp.ne.s32.totalorder %s65, %s81
      %p83 = scmp.eq.s32.totalorder %s43, 0
      %p84 = por %p82, %p83
      %s85 = sadd.s32 %s44, %s45
      %s86 = sadd.s32 %s56, %s52
      %s87 = ssub.s32 %s85, %s86
      %p88 = scmp.eq.s32.totalorder %s87, 0
      %s90 = sadd.s32 %s89, 1
      %s91 = scalar_select %p88, %s89, %s90
      %p94 = pneg %p88
      %p95 = scmp.eq.s32.totalorder %s37, 1
      %p96 = por %p94, %p95
      %p97 = scmp.ne.s32.totalorder %s89, %s92
      %p98 = scmp.eq.s32.totalorder %s37, 0
      %p99 = por %p97, %p98
      %p100 = scmp.ne.s32.totalorder %s89, %s92
      %p101 = scmp.eq.s32.totalorder %s42, 1
      %p102 = por %p100, %p101
      %p103 = scmp.ne.s32.totalorder %s92, %s93
      %p104 = scmp.eq.s32.totalorder %s42, 0
      %p105 = por %p103, %p104
      %p106 = scmp.ne.s32.totalorder %s92, %s93
      %p107 = scmp.eq.s32.totalorder %s43, 1
      %p108 = por %p106, %p107
      %p110 = scmp.ne.s32.totalorder %s93, %s109
      %p111 = scmp.eq.s32.totalorder %s43, 0
      %p112 = por %p110, %p111
      %s113 = sadd.s32 %s44, %s45
      %s114 = sadd.s32 %s56, %s52
      %s115 = ssub.s32 %s113, %s114
      %p116 = scmp.eq.s32.totalorder %s115, 0
      %s118 = sadd.s32 %s117, 1
      %s119 = scalar_select %p116, %s117, %s118
      %p122 = pneg %p116
      %p123 = scmp.eq.s32.totalorder %s37, 1
      %p124 = por %p122, %p123
      %p125 = scmp.ne.s32.totalorder %s117, %s120
      %p126 = scmp.eq.s32.totalorder %s37, 0
      %p127 = por %p125, %p126
      %p128 = scmp.ne.s32.totalorder %s117, %s120
      %p129 = scmp.eq.s32.totalorder %s42, 1
      %p130 = por %p128, %p129
      %p131 = scmp.ne.s32.totalorder %s120, %s121
      %p132 = scmp.eq.s32.totalorder %s42, 0
      %p133 = por %p131, %p132
      %p134 = scmp.ne.s32.totalorder %s120, %s121
      %p135 = scmp.eq.s32.totalorder %s43, 1
      %p136 = por %p134, %p135
      %p138 = scmp.ne.s32.totalorder %s121, %s137
      %p139 = scmp.eq.s32.totalorder %s43, 0
      %p140 = por %p138, %p139
      %s141 = sadd.s32 %s44, %s45
      %s142 = sadd.s32 %s56, %s52
      %s143 = ssub.s32 %s141, %s142
      %p144 = scmp.eq.s32.totalorder %s143, 0
      %s146 = sadd.s32 %s145, 1
      %s147 = scalar_select %p144, %s145, %s146
      %p150 = pneg %p144
      %p151 = scmp.eq.s32.totalorder %s37, 1
      %p152 = por %p150, %p151
      %p153 = scmp.ne.s32.totalorder %s145, %s148
      %p154 = scmp.eq.s32.totalorder %s37, 0
      %p155 = por %p153, %p154
      %p156 = scmp.ne.s32.totalorder %s145, %s148
      %p157 = scmp.eq.s32.totalorder %s42, 1
      %p158 = por %p156, %p157
      %p159 = scmp.ne.s32.totalorder %s148, %s149
      %p160 = scmp.eq.s32.totalorder %s42, 0
      %p161 = por %p159, %p160
      %p162 = scmp.ne.s32.totalorder %s148, %s149
      %p163 = scmp.eq.s32.totalorder %s43, 1
      %p164 = por %p162, %p163
      %p166 = scmp.ne.s32.totalorder %s149, %s165
      %p167 = scmp.eq.s32.totalorder %s43, 0
      %p168 = por %p166, %p167
      %s169 = sadd.s32 %s44, %s45
      %s170 = sadd.s32 %s56, %s52
      %s171 = ssub.s32 %s169, %s170
      %p172 = scmp.eq.s32.totalorder %s171, 0
      %s174 = sadd.s32 %s173, 1
      %s175 = scalar_select %p172, %s173, %s174
      %p178 = pneg %p172
      %p179 = scmp.eq.s32.totalorder %s37, 1
      %p180 = por %p178, %p179
      %p181 = scmp.ne.s32.totalorder %s173, %s176
      %p182 = scmp.eq.s32.totalorder %s37, 0
      %p183 = por %p181, %p182
      %p184 = scmp.ne.s32.totalorder %s173, %s176
      %p185 = scmp.eq.s32.totalorder %s42, 1
      %p186 = por %p184, %p185
      %p187 = scmp.ne.s32.totalorder %s176, %s177
      %p188 = scmp.eq.s32.totalorder %s42, 0
      %p189 = por %p187, %p188
      %p190 = scmp.ne.s32.totalorder %s176, %s177
      %p191 = scmp.eq.s32.totalorder %s43, 1
      %p192 = por %p190, %p191
      %p194 = scmp.ne.s32.totalorder %s177, %s193
      %p195 = scmp.eq.s32.totalorder %s43, 0
      %p196 = por %p194, %p195
      %s197 = sadd.s32 %s44, %s45
      %s198 = sadd.s32 %s56, %s52
      %s199 = ssub.s32 %s197, %s198
      %p200 = scmp.eq.s32.totalorder %s199, 0
      %s202 = sadd.s32 %s201, 1
      %s203 = scalar_select %p200, %s201, %s202
      %p206 = pneg %p200
      %p207 = scmp.eq.s32.totalorder %s37, 1
      %p208 = por %p206, %p207
      %p209 = scmp.ne.s32.totalorder %s201, %s204
      %p210 = scmp.eq.s32.totalorder %s37, 0
      %p211 = por %p209, %p210
      %p212 = scmp.ne.s32.totalorder %s201, %s204
      %p213 = scmp.eq.s32.totalorder %s42, 1
      %p214 = por %p212, %p213
      %p215 = scmp.ne.s32.totalorder %s204, %s205
      %p216 = scmp.eq.s32.totalorder %s42, 0
      %p217 = por %p215, %p216
      %p218 = scmp.ne.s32.totalorder %s204, %s205
      %p219 = scmp.eq.s32.totalorder %s43, 1
      %p220 = por %p218, %p219
      %p222 = scmp.ne.s32.totalorder %s205, %s221
      %p223 = scmp.eq.s32.totalorder %s43, 0
      %p224 = por %p222, %p223
      %s225 = sadd.s32 %s44, %s45
      %s226 = sadd.s32 %s56, %s52
      %s227 = ssub.s32 %s225, %s226
      %p228 = scmp.eq.s32.totalorder %s227, 0
      %s230 = sadd.s32 %s229, 1
      %s231 = scalar_select %p228, %s229, %s230
      %p234 = pneg %p228
      %p235 = scmp.eq.s32.totalorder %s37, 1
      %p236 = por %p234, %p235
      %p237 = scmp.ne.s32.totalorder %s229, %s232
      %p238 = scmp.eq.s32.totalorder %s37, 0
      %p239 = por %p237, %p238
      %p240 = scmp.ne.s32.totalorder %s229, %s232
      %p241 = scmp.eq.s32.totalorder %s42, 1
      %p242 = por %p240, %p241
      %p243 = scmp.ne.s32.totalorder %s232, %s233
      %p244 = scmp.eq.s32.totalorder %s42, 0
      %p245 = por %p243, %p244
      %p246 = scmp.ne.s32.totalorder %s232, %s233
      %p247 = scmp.eq.s32.totalorder %s43, 1
      %p248 = por %p246, %p247
      %p250 = scmp.ne.s32.totalorder %s233, %s249
      %p251 = scmp.eq.s32.totalorder %s43, 0
      %p252 = por %p250, %p251
      %s253 = sadd.s32 %s44, %s45
      %s254 = sadd.s32 %s56, %s52
      %s255 = ssub.s32 %s253, %s254
      %p256 = scmp.eq.s32.totalorder %s255, 0
      %s258 = sadd.s32 %s257, 1
      %s259 = scalar_select %p256, %s257, %s258
      %p262 = pneg %p256
      %p263 = scmp.eq.s32.totalorder %s37, 1
      %p264 = por %p262, %p263
      %p265 = scmp.ne.s32.totalorder %s257, %s260
      %p266 = scmp.eq.s32.totalorder %s37, 0
      %p267 = por %p265, %p266
      %p268 = scmp.ne.s32.totalorder %s257, %s260
      %p269 = scmp.eq.s32.totalorder %s42, 1
      %p270 = por %p268, %p269
      %p271 = scmp.ne.s32.totalorder %s260, %s261
      %p272 = scmp.eq.s32.totalorder %s42, 0
      %p273 = por %p271, %p272
      %p274 = scmp.ne.s32.totalorder %s260, %s261
      %p275 = scmp.eq.s32.totalorder %s43, 1
      %p276 = por %p274, %p275
      %p278 = scmp.ne.s32.totalorder %s261, %s277
      %p279 = scmp.eq.s32.totalorder %s43, 0
      %p280 = por %p278, %p279
      %s281 = sadd.s32 %s44, %s45
      %s282 = sadd.s32 %s56, %s52
      %s283 = ssub.s32 %s281, %s282
      %p284 = scmp.eq.s32.totalorder %s283, 0
      %s286 = sadd.s32 %s285, 1
      %s287 = scalar_select %p284, %s285, %s286
      %p290 = pneg %p284
      %p291 = scmp.eq.s32.totalorder %s37, 1
      %p292 = por %p290, %p291
      %p293 = scmp.ne.s32.totalorder %s285, %s288
      %p294 = scmp.eq.s32.totalorder %s37, 0
      %p295 = por %p293, %p294
      %p296 = scmp.ne.s32.totalorder %s285, %s288
      %p297 = scmp.eq.s32.totalorder %s42, 1
      %p298 = por %p296, %p297
      %p299 = scmp.ne.s32.totalorder %s288, %s289
      %p300 = scmp.eq.s32.totalorder %s42, 0
      %p301 = por %p299, %p300
      %p302 = scmp.ne.s32.totalorder %s288, %s289
      %p303 = scmp.eq.s32.totalorder %s43, 1
      %p304 = por %p302, %p303
      %p306 = scmp.ne.s32.totalorder %s289, %s305
      %p307 = scmp.eq.s32.totalorder %s43, 0
      %p308 = por %p306, %p307
      %s309 = sadd.s32 %s44, %s45
      %s310 = sadd.s32 %s56, %s52
      %s311 = ssub.s32 %s309, %s310
      %p312 = scmp.eq.s32.totalorder %s311, 0
      %s314 = sadd.s32 %s313, 1
      %s315 = scalar_select %p312, %s313, %s314
      %p318 = pneg %p312
      %p319 = scmp.eq.s32.totalorder %s37, 1
      %p320 = por %p318, %p319
      %p321 = scmp.ne.s32.totalorder %s313, %s316
      %p322 = scmp.eq.s32.totalorder %s37, 0
      %p323 = por %p321, %p322
      %p324 = scmp.ne.s32.totalorder %s313, %s316
      %p325 = scmp.eq.s32.totalorder %s42, 1
      %p326 = por %p324, %p325
      %p327 = scmp.ne.s32.totalorder %s316, %s317
      %p328 = scmp.eq.s32.totalorder %s42, 0
      %p329 = por %p327, %p328
      %p330 = scmp.ne.s32.totalorder %s316, %s317
      %p331 = scmp.eq.s32.totalorder %s43, 1
      %p332 = por %p330, %p331
      %p334 = scmp.ne.s32.totalorder %s317, %s333
      %p335 = scmp.eq.s32.totalorder %s43, 0
      %p336 = por %p334, %p335
      %s337 = ssub.s32 %s44, %s56
      %p338 = scmp.eq.s32.totalorder %s337, 0
      %s340 = sadd.s32 %s339, 1
      %s341 = scalar_select %p338, %s339, %s340
      %p344 = pneg %p338
      %p345 = scmp.eq.s32.totalorder %s37, 1
      %p346 = por %p344, %p345
      %p347 = scmp.ne.s32.totalorder %s339, %s342
      %p348 = scmp.eq.s32.totalorder %s37, 0
      %p349 = por %p347, %p348
      %p350 = scmp.ne.s32.totalorder %s339, %s342
      %p351 = scmp.eq.s32.totalorder %s42, 1
      %p352 = por %p350, %p351
      %p353 = scmp.ne.s32.totalorder %s342, %s343
      %p354 = scmp.eq.s32.totalorder %s42, 0
      %p355 = por %p353, %p354
      %p356 = scmp.ne.s32.totalorder %s342, %s343
      %p357 = scmp.eq.s32.totalorder %s43, 1
      %p358 = por %p356, %p357
      %p360 = scmp.ne.s32.totalorder %s343, %s359
      %p361 = scmp.eq.s32.totalorder %s43, 0
      %p362 = por %p360, %p361
      %p363 = scmp.le.s32.totalorder 1, %s37
      %p364 = scmp.lt.s32.totalorder %s37, 3
      %p365 = pnand %p363, %p364
      %p366 = pneg %p365
      // Predicated region
      $region9: #{tpu_custom_call.1} parent=5 // pred_check
        _
      $region10: #{tpu_custom_call.1} parent=5 // pred_check_branch
        %368 = sbr.rel (%p365) target = $region12
      $region11: #{tpu_custom_call.1} parent=5 // pred_region
        %s369 = ssub.s32 %s37, 1
      $region12: #{tpu_custom_call.1} parent=5 // pred_fallthru
        _
      %p370 = scmp.lt.s32.totalorder %s37, 2
      // Predicated region
      $region13: #{tpu_custom_call.1} parent=5 // pred_check
        %p371 = pneg %p370
      $region14: #{tpu_custom_call.1} parent=5 // pred_check_branch
        %373 = sbr.rel (%p371) target = $region16
      $region15: #{tpu_custom_call.1} parent=5 // pred_region
        // Predicated region
        $region17: #{tpu_custom_call.1} parent=15 // pred_check
          %p374 = pneg %p71
        $region18: #{tpu_custom_call.1} parent=15 // pred_check_branch
          %376 = sbr.rel (%p374) target = $region20
        $region19: #{tpu_custom_call.1} parent=15 // pred_region
          %s377 = sand.u32 %s61, 1
          %s378 = scalar_lea.sflag [#allocation3], %s377
          %s379 = sand.u32 %s61, 1
          %s380 = smul.addr %s379, 8
          %s381 = scalar_lea.vmem [#allocation2], %s380
          %s382 = sadd.s32 %s44, %s45
          %384 = vsyncadd %s378, 0
          %s385 = smul.addr %s382, 8
          %s386 = scalar_lea.hbm %s0, %s385
          %s388 = sshll.u32 %s386, 4
          %s389 = int_to_ptr.hbm [resolvable:$true] %s388
          %s390 = sshll.u32 %s381, 4
          %s391 = int_to_ptr.vmem [resolvable:$true] %s390
          %393 = dma.hbm_to_vmem [thread:$0]  %s389, 128, %s391, %s378
        $region20: #{tpu_custom_call.1} parent=15 // pred_fallthru
          _
        // Predicated region
        $region21: #{tpu_custom_call.1} parent=15 // pred_check
          %p394 = pneg %p99
        $region22: #{tpu_custom_call.1} parent=15 // pred_check_branch
          %396 = sbr.rel (%p394) target = $region24
        $region23: #{tpu_custom_call.1} parent=15 // pred_region
          %s397 = sand.u32 %s37, 1
          %s398 = scalar_lea.sflag [#allocation6], %s397
          %s399 = sand.u32 %s89, 1
          %s400 = smul.addr %s399, 8
          %s401 = scalar_lea.vmem [#allocation5], %s400
          %s402 = sadd.s32 %s44, %s45
          %404 = vsyncadd %s398, 0
          %s405 = smul.addr %s402, 8
          %s406 = scalar_lea.hbm %s1, %s405
          %s408 = sshll.u32 %s406, 4
          %s409 = int_to_ptr.hbm [resolvable:$true] %s408
          %s410 = sshll.u32 %s401, 4
          %s411 = int_to_ptr.vmem [resolvable:$true] %s410
          %413 = dma.hbm_to_vmem [thread:$0]  %s409, 128, %s411, %s398
        $region24: #{tpu_custom_call.1} parent=15 // pred_fallthru
          _
        // Predicated region
        $region25: #{tpu_custom_call.1} parent=15 // pred_check
          %p414 = pneg %p127
        $region26: #{tpu_custom_call.1} parent=15 // pred_check_branch
          %416 = sbr.rel (%p414) target = $region28
        $region27: #{tpu_custom_call.1} parent=15 // pred_region
          %s417 = sand.u32 %s37, 1
          %s418 = scalar_lea.sflag [#allocation6], %s417
          %s419 = sand.u32 %s117, 1
          %s420 = smul.addr %s419, 8
          %s421 = scalar_lea.vmem [#allocation7], %s420
          %s422 = sadd.s32 %s44, %s45
          %424 = vsyncadd %s418, 0
          %s425 = smul.addr %s422, 8
          %s426 = scalar_lea.hbm %s2, %s425
          %s428 = sshll.u32 %s426, 4
          %s429 = int_to_ptr.hbm [resolvable:$true] %s428
          %s430 = sshll.u32 %s421, 4
          %s431 = int_to_ptr.vmem [resolvable:$true] %s430
          %433 = dma.hbm_to_vmem [thread:$0]  %s429, 128, %s431, %s418
        $region28: #{tpu_custom_call.1} parent=15 // pred_fallthru
          _
        // Predicated region
        $region29: #{tpu_custom_call.1} parent=15 // pred_check
          %p434 = pneg %p155
        $region30: #{tpu_custom_call.1} parent=15 // pred_check_branch
          %436 = sbr.rel (%p434) target = $region32
        $region31: #{tpu_custom_call.1} parent=15 // pred_region
          %s437 = sand.u32 %s37, 1
          %s438 = scalar_lea.sflag [#allocation9], %s437
          %s439 = sand.u32 %s145, 1
          %s440 = smul.addr %s439, 8
          %s441 = scalar_lea.vmem [#allocation8], %s440
          %s442 = sadd.s32 %s44, %s45
          %444 = vsyncadd %s438, 0
          %s445 = smul.addr %s442, 8
          %s446 = scalar_lea.hbm %s3, %s445
          %s448 = sshll.u32 %s446, 4
          %s449 = int_to_ptr.hbm [resolvable:$true] %s448
          %s450 = sshll.u32 %s441, 4
          %s451 = int_to_ptr.vmem [resolvable:$true] %s450
          %453 = dma.hbm_to_vmem [thread:$0]  %s449, 128, %s451, %s438
        $region32: #{tpu_custom_call.1} parent=15 // pred_fallthru
          _
        // Predicated region
        $region33: #{tpu_custom_call.1} parent=15 // pred_check
          %p454 = pneg %p183
        $region34: #{tpu_custom_call.1} parent=15 // pred_check_branch
          %456 = sbr.rel (%p454) target = $region36
        $region35: #{tpu_custom_call.1} parent=15 // pred_region
          %s457 = sand.u32 %s37, 1
          %s458 = scalar_lea.sflag [#allocation9], %s457
          %s459 = sand.u32 %s173, 1
          %s460 = smul.addr %s459, 8
          %s461 = scalar_lea.vmem [#allocation10], %s460
          %s462 = sadd.s32 %s44, %s45
          %464 = vsyncadd %s458, 0
          %s465 = smul.addr %s462, 8
          %s466 = scalar_lea.hbm %s4, %s465
          %s468 = sshll.u32 %s466, 4
          %s469 = int_to_ptr.hbm [resolvable:$true] %s468
          %s470 = sshll.u32 %s461, 4
          %s471 = int_to_ptr.vmem [resolvable:$true] %s470
          %473 = dma.hbm_to_vmem [thread:$0]  %s469, 128, %s471, %s458
        $region36: #{tpu_custom_call.1} parent=15 // pred_fallthru
          _
        // Predicated region
        $region37: #{tpu_custom_call.1} parent=15 // pred_check
          %p474 = pneg %p211
        $region38: #{tpu_custom_call.1} parent=15 // pred_check_branch
          %476 = sbr.rel (%p474) target = $region40
        $region39: #{tpu_custom_call.1} parent=15 // pred_region
          %s477 = sand.u32 %s37, 1
          %s478 = scalar_lea.sflag [#allocation12], %s477
          %s479 = sand.u32 %s201, 1
          %s480 = smul.addr %s479, 8
          %s481 = scalar_lea.vmem [#allocation11], %s480
          %s482 = sadd.s32 %s44, %s45
          %484 = vsyncadd %s478, 0
          %s485 = smul.addr %s482, 8
          %s486 = scalar_lea.hbm %s5, %s485
          %s488 = sshll.u32 %s486, 4
          %s489 = int_to_ptr.hbm [resolvable:$true] %s488
          %s490 = sshll.u32 %s481, 4
          %s491 = int_to_ptr.vmem [resolvable:$true] %s490
          %493 = dma.hbm_to_vmem [thread:$0]  %s489, 128, %s491, %s478
        $region40: #{tpu_custom_call.1} parent=15 // pred_fallthru
          _
        // Predicated region
        $region41: #{tpu_custom_call.1} parent=15 // pred_check
          %p494 = pneg %p239
        $region42: #{tpu_custom_call.1} parent=15 // pred_check_branch
          %496 = sbr.rel (%p494) target = $region44
        $region43: #{tpu_custom_call.1} parent=15 // pred_region
          %s497 = sand.u32 %s37, 1
          %s498 = scalar_lea.sflag [#allocation12], %s497
          %s499 = sand.u32 %s229, 1
          %s500 = smul.addr %s499, 8
          %s501 = scalar_lea.vmem [#allocation13], %s500
          %s502 = sadd.s32 %s44, %s45
          %504 = vsyncadd %s498, 0
          %s505 = smul.addr %s502, 8
          %s506 = scalar_lea.hbm %s6, %s505
          %s508 = sshll.u32 %s506, 4
          %s509 = int_to_ptr.hbm [resolvable:$true] %s508
          %s510 = sshll.u32 %s501, 4
          %s511 = int_to_ptr.vmem [resolvable:$true] %s510
          %513 = dma.hbm_to_vmem [thread:$0]  %s509, 128, %s511, %s498
        $region44: #{tpu_custom_call.1} parent=15 // pred_fallthru
          _
        // Predicated region
        $region45: #{tpu_custom_call.1} parent=15 // pred_check
          %p514 = pneg %p267
        $region46: #{tpu_custom_call.1} parent=15 // pred_check_branch
          %516 = sbr.rel (%p514) target = $region48
        $region47: #{tpu_custom_call.1} parent=15 // pred_region
          %s517 = sand.u32 %s37, 1
          %s518 = scalar_lea.sflag [#allocation15], %s517
          %s519 = sand.u32 %s257, 1
          %s520 = smul.addr %s519, 8
          %s521 = scalar_lea.vmem [#allocation14], %s520
          %s522 = sadd.s32 %s44, %s45
          %524 = vsyncadd %s518, 0
          %s525 = smul.addr %s522, 8
          %s526 = scalar_lea.hbm %s7, %s525
          %s528 = sshll.u32 %s526, 4
          %s529 = int_to_ptr.hbm [resolvable:$true] %s528
          %s530 = sshll.u32 %s521, 4
          %s531 = int_to_ptr.vmem [resolvable:$true] %s530
          %533 = dma.hbm_to_vmem [thread:$0]  %s529, 128, %s531, %s518
        $region48: #{tpu_custom_call.1} parent=15 // pred_fallthru
          _
        // Predicated region
        $region49: #{tpu_custom_call.1} parent=15 // pred_check
          %p534 = pneg %p295
        $region50: #{tpu_custom_call.1} parent=15 // pred_check_branch
          %536 = sbr.rel (%p534) target = $region52
        $region51: #{tpu_custom_call.1} parent=15 // pred_region
          %s537 = sand.u32 %s37, 1
          %s538 = scalar_lea.sflag [#allocation15], %s537
          %s539 = sand.u32 %s285, 1
          %s540 = smul.addr %s539, 8
          %s541 = scalar_lea.vmem [#allocation16], %s540
          %s542 = sadd.s32 %s44, %s45
          %544 = vsyncadd %s538, 0
          %s545 = smul.addr %s542, 8
          %s546 = scalar_lea.hbm %s8, %s545
          %s548 = sshll.u32 %s546, 4
          %s549 = int_to_ptr.hbm [resolvable:$true] %s548
          %s550 = sshll.u32 %s541, 4
          %s551 = int_to_ptr.vmem [resolvable:$true] %s550
          %553 = dma.hbm_to_vmem [thread:$0]  %s549, 128, %s551, %s538
        $region52: #{tpu_custom_call.1} parent=15 // pred_fallthru
          _
        // Predicated region
        $region53: #{tpu_custom_call.1} parent=15 // pred_check
          %p554 = pneg %p323
        $region54: #{tpu_custom_call.1} parent=15 // pred_check_branch
          %556 = sbr.rel (%p554) target = $region56
        $region55: #{tpu_custom_call.1} parent=15 // pred_region
          %s557 = sand.u32 %s313, 1
          %s558 = scalar_lea.sflag [#allocation18], %s557
          %s559 = sand.u32 %s313, 1
          %s560 = smul.addr %s559, 8
          %s561 = scalar_lea.vmem [#allocation17], %s560
          %s562 = sadd.s32 %s44, %s45
          %564 = vsyncadd %s558, 0
          %s565 = smul.addr %s562, 8
          %s566 = scalar_lea.hbm %s9, %s565
          %s568 = sshll.u32 %s566, 4
          %s569 = int_to_ptr.hbm [resolvable:$true] %s568
          %s570 = sshll.u32 %s561, 4
          %s571 = int_to_ptr.vmem [resolvable:$true] %s570
          %573 = dma.hbm_to_vmem [thread:$0]  %s569, 128, %s571, %s558
        $region56: #{tpu_custom_call.1} parent=15 // pred_fallthru
          _
      $region16: #{tpu_custom_call.1} parent=5 // pred_fallthru
        _
      %p574 = scmp.le.s32.totalorder 1, %s37
      %p575 = scmp.lt.s32.totalorder %s37, 3
      %p576 = pnand %p574, %p575
      %p577 = pneg %p576
      // Predicated region
      $region57: #{tpu_custom_call.1} parent=5 // pred_check
        _
      $region58: #{tpu_custom_call.1} parent=5 // pred_check_branch
        %579 = sbr.rel (%p576) target = $region60
      $region59: #{tpu_custom_call.1} parent=5 // pred_region
        %s580 = ssub.s32 %s37, 1
        %s581 = sand.u32 %s64, 1
        %s582 = scalar_lea.sflag [#allocation3], %s581
        %s583 = sand.u32 %s64, 1
        %s584 = smul.addr %s583, 8
        %s585 = scalar_lea.vmem [#allocation2], %s584
        // Predicated region
        $region61: #{tpu_custom_call.1} parent=59 // pred_check
          %p586 = pneg %p77
        $region62: #{tpu_custom_call.1} parent=59 // pred_check_branch
          %588 = sbr.rel (%p586) target = $region64
        $region63: #{tpu_custom_call.1} parent=59 // pred_region
          %590 = dma.done %s582, 128
        $region64: #{tpu_custom_call.1} parent=59 // pred_fallthru
          _
        %s591 = sand.u32 %s42, 1
        %s592 = scalar_lea.sflag [#allocation6], %s591
        %s593 = sand.u32 %s92, 1
        %s594 = smul.addr %s593, 8
        %s595 = scalar_lea.vmem [#allocation5], %s594
        // Predicated region
        $region65: #{tpu_custom_call.1} parent=59 // pred_check
          %p596 = pneg %p105
        $region66: #{tpu_custom_call.1} parent=59 // pred_check_branch
          %598 = sbr.rel (%p596) target = $region68
        $region67: #{tpu_custom_call.1} parent=59 // pred_region
          %600 = dma.done %s592, 128
        $region68: #{tpu_custom_call.1} parent=59 // pred_fallthru
          _
        %s601 = sand.u32 %s42, 1
        %s602 = scalar_lea.sflag [#allocation6], %s601
        %s603 = sand.u32 %s120, 1
        %s604 = smul.addr %s603, 8
        %s605 = scalar_lea.vmem [#allocation7], %s604
        // Predicated region
        $region69: #{tpu_custom_call.1} parent=59 // pred_check
          %p606 = pneg %p133
        $region70: #{tpu_custom_call.1} parent=59 // pred_check_branch
          %608 = sbr.rel (%p606) target = $region72
        $region71: #{tpu_custom_call.1} parent=59 // pred_region
          %610 = dma.done %s602, 128
        $region72: #{tpu_custom_call.1} parent=59 // pred_fallthru
          _
        %s611 = sand.u32 %s42, 1
        %s612 = scalar_lea.sflag [#allocation9], %s611
        %s613 = sand.u32 %s148, 1
        %s614 = smul.addr %s613, 8
        %s615 = scalar_lea.vmem [#allocation8], %s614
        // Predicated region
        $region73: #{tpu_custom_call.1} parent=59 // pred_check
          %p616 = pneg %p161
        $region74: #{tpu_custom_call.1} parent=59 // pred_check_branch
          %618 = sbr.rel (%p616) target = $region76
        $region75: #{tpu_custom_call.1} parent=59 // pred_region
          %620 = dma.done %s612, 128
        $region76: #{tpu_custom_call.1} parent=59 // pred_fallthru
          _
        %s621 = sand.u32 %s42, 1
        %s622 = scalar_lea.sflag [#allocation9], %s621
        %s623 = sand.u32 %s176, 1
        %s624 = smul.addr %s623, 8
        %s625 = scalar_lea.vmem [#allocation10], %s624
        // Predicated region
        $region77: #{tpu_custom_call.1} parent=59 // pred_check
          %p626 = pneg %p189
        $region78: #{tpu_custom_call.1} parent=59 // pred_check_branch
          %628 = sbr.rel (%p626) target = $region80
        $region79: #{tpu_custom_call.1} parent=59 // pred_region
          %630 = dma.done %s622, 128
        $region80: #{tpu_custom_call.1} parent=59 // pred_fallthru
          _
        %s631 = sand.u32 %s42, 1
        %s632 = scalar_lea.sflag [#allocation12], %s631
        %s633 = sand.u32 %s204, 1
        %s634 = smul.addr %s633, 8
        %s635 = scalar_lea.vmem [#allocation11], %s634
        // Predicated region
        $region81: #{tpu_custom_call.1} parent=59 // pred_check
          %p636 = pneg %p217
        $region82: #{tpu_custom_call.1} parent=59 // pred_check_branch
          %638 = sbr.rel (%p636) target = $region84
        $region83: #{tpu_custom_call.1} parent=59 // pred_region
          %640 = dma.done %s632, 128
        $region84: #{tpu_custom_call.1} parent=59 // pred_fallthru
          _
        %s641 = sand.u32 %s42, 1
        %s642 = scalar_lea.sflag [#allocation12], %s641
        %s643 = sand.u32 %s232, 1
        %s644 = smul.addr %s643, 8
        %s645 = scalar_lea.vmem [#allocation13], %s644
        // Predicated region
        $region85: #{tpu_custom_call.1} parent=59 // pred_check
          %p646 = pneg %p245
        $region86: #{tpu_custom_call.1} parent=59 // pred_check_branch
          %648 = sbr.rel (%p646) target = $region88
        $region87: #{tpu_custom_call.1} parent=59 // pred_region
          %650 = dma.done %s642, 128
        $region88: #{tpu_custom_call.1} parent=59 // pred_fallthru
          _
        %s651 = sand.u32 %s42, 1
        %s652 = scalar_lea.sflag [#allocation15], %s651
        %s653 = sand.u32 %s260, 1
        %s654 = smul.addr %s653, 8
        %s655 = scalar_lea.vmem [#allocation14], %s654
        // Predicated region
        $region89: #{tpu_custom_call.1} parent=59 // pred_check
          %p656 = pneg %p273
        $region90: #{tpu_custom_call.1} parent=59 // pred_check_branch
          %658 = sbr.rel (%p656) target = $region92
        $region91: #{tpu_custom_call.1} parent=59 // pred_region
          %660 = dma.done %s652, 128
        $region92: #{tpu_custom_call.1} parent=59 // pred_fallthru
          _
        %s661 = sand.u32 %s42, 1
        %s662 = scalar_lea.sflag [#allocation15], %s661
        %s663 = sand.u32 %s288, 1
        %s664 = smul.addr %s663, 8
        %s665 = scalar_lea.vmem [#allocation16], %s664
        // Predicated region
        $region93: #{tpu_custom_call.1} parent=59 // pred_check
          %p666 = pneg %p301
        $region94: #{tpu_custom_call.1} parent=59 // pred_check_branch
          %668 = sbr.rel (%p666) target = $region96
        $region95: #{tpu_custom_call.1} parent=59 // pred_region
          %670 = dma.done %s662, 128
        $region96: #{tpu_custom_call.1} parent=59 // pred_fallthru
          _
        %s671 = sand.u32 %s316, 1
        %s672 = scalar_lea.sflag [#allocation18], %s671
        %s673 = sand.u32 %s316, 1
        %s674 = smul.addr %s673, 8
        %s675 = scalar_lea.vmem [#allocation17], %s674
        // Predicated region
        $region97: #{tpu_custom_call.1} parent=59 // pred_check
          %p676 = pneg %p329
        $region98: #{tpu_custom_call.1} parent=59 // pred_check_branch
          %678 = sbr.rel (%p676) target = $region100
        $region99: #{tpu_custom_call.1} parent=59 // pred_region
          %680 = dma.done %s672, 128
        $region100: #{tpu_custom_call.1} parent=59 // pred_fallthru
          _
        %s681 = sand.u32 %s64, 1
        %s682 = scalar_lea.sflag [#allocation3], %s681
        %s683 = sand.u32 %s64, 1
        %s684 = smul.addr %s683, 8
        %s685 = scalar_lea.vmem [#allocation2], %s684
        %p686 = pneg %p77
        %p687 = pneg %p74
        %s688 = sand.u32 %s42, 1
        %s689 = scalar_lea.sflag [#allocation6], %s688
        %s690 = sand.u32 %s92, 1
        %s691 = smul.addr %s690, 8
        %s692 = scalar_lea.vmem [#allocation5], %s691
        %p693 = pneg %p105
        %p694 = pneg %p102
        %s695 = sand.u32 %s42, 1
        %s696 = scalar_lea.sflag [#allocation6], %s695
        %s697 = sand.u32 %s120, 1
        %s698 = smul.addr %s697, 8
        %s699 = scalar_lea.vmem [#allocation7], %s698
        %p700 = pneg %p133
        %p701 = pneg %p130
        %s702 = sand.u32 %s42, 1
        %s703 = scalar_lea.sflag [#allocation9], %s702
        %s704 = sand.u32 %s148, 1
        %s705 = smul.addr %s704, 8
        %s706 = scalar_lea.vmem [#allocation8], %s705
        %p707 = pneg %p161
        %p708 = pneg %p158
        %s709 = sand.u32 %s42, 1
        %s710 = scalar_lea.sflag [#allocation9], %s709
        %s711 = sand.u32 %s176, 1
        %s712 = smul.addr %s711, 8
        %s713 = scalar_lea.vmem [#allocation10], %s712
        %p714 = pneg %p189
        %p715 = pneg %p186
        %s716 = sand.u32 %s42, 1
        %s717 = scalar_lea.sflag [#allocation12], %s716
        %s718 = sand.u32 %s204, 1
        %s719 = smul.addr %s718, 8
        %s720 = scalar_lea.vmem [#allocation11], %s719
        %p721 = pneg %p217
        %p722 = pneg %p214
        %s723 = sand.u32 %s42, 1
        %s724 = scalar_lea.sflag [#allocation12], %s723
        %s725 = sand.u32 %s232, 1
        %s726 = smul.addr %s725, 8
        %s727 = scalar_lea.vmem [#allocation13], %s726
        %p728 = pneg %p245
        %p729 = pneg %p242
        %s730 = sand.u32 %s42, 1
        %s731 = scalar_lea.sflag [#allocation15], %s730
        %s732 = sand.u32 %s260, 1
        %s733 = smul.addr %s732, 8
        %s734 = scalar_lea.vmem [#allocation14], %s733
        %p735 = pneg %p273
        %p736 = pneg %p270
        %s737 = sand.u32 %s42, 1
        %s738 = scalar_lea.sflag [#allocation15], %s737
        %s739 = sand.u32 %s288, 1
        %s740 = smul.addr %s739, 8
        %s741 = scalar_lea.vmem [#allocation16], %s740
        %p742 = pneg %p301
        %p743 = pneg %p298
        %s744 = sand.u32 %s316, 1
        %s745 = scalar_lea.sflag [#allocation18], %s744
        %s746 = sand.u32 %s316, 1
        %s747 = smul.addr %s746, 8
        %s748 = scalar_lea.vmem [#allocation17], %s747
        %p749 = pneg %p329
        %p750 = pneg %p326
        %p751 = pneg %p355
        %p752 = pneg %p352
        %s753 = sand.u32 %s342, 1
        %s754 = scalar_lea.sflag [#allocation4], %s753
        %s755 = sand.u32 %s342, 1
        %s756 = smul.addr %s755, 80
        %s757 = scalar_lea.vmem [#allocation19], %s756
        %s758 = sadd.s32 %s46, %s47
        %s759 = sadd.s32 %s46, %s47
        %s760 = sadd.s32 %s46, %s47
        %s761 = sadd.s32 %s46, %s47
        %s762 = sadd.s32 %s46, %s47
        %s763 = sadd.s32 %s46, %s47
        %s764 = sadd.s32 %s46, %s47
        %s765 = sadd.s32 %s46, %s47
        %s766 = sadd.s32 %s46, %s47
        %s767 = sadd.s32 %s46, %s47
        %p768 = scmp.eq.s32.totalorder %s47, 0
        // Predicated region
        $region101: #{tpu_custom_call.1} parent=59 // pred_check
          %p769 = pneg %p768
        $region102: #{tpu_custom_call.1} parent=59 // pred_check_branch
          %771 = sbr.rel (%p769) target = $region104
        $region103: #{tpu_custom_call.1} parent=59 // pred_region
          %772 = vst [vmem:[%s757] sm:$0xff] 0.0
          %773 = vst [vmem:[%s757 + $0x8] sm:$0xff] 0.0
          %774 = vst [vmem:[%s757 + $0x10] sm:$0xff] 0.0
          %775 = vst [vmem:[%s757 + $0x18] sm:$0xff] 0.0
          %776 = vst [vmem:[%s757 + $0x20] sm:$0xff] 0.0
          %777 = vst [vmem:[%s757 + $0x28] sm:$0xff] 0.0
          %778 = vst [vmem:[%s757 + $0x30] sm:$0xff] 0.0
          %779 = vst [vmem:[%s757 + $0x38] sm:$0xff] 0.0
          %780 = vst [vmem:[%s757 + $0x40] sm:$0xff] 0.0
          %781 = vst [vmem:[%s757 + $0x48] sm:$0xff] 0.0
        $region104: #{tpu_custom_call.1} parent=59 // pred_fallthru
          _
        %v782 = vld [vmem:[%s585] sm:$0xff]
        %vm783 = vcmp.eq.f32.partialorder %v782, 1.0
        %v784 = vsel %vm783, 1, 0
        %v785 = vcvt.s32.f32 %v784
        %vm786 = vcmp.lt.f32.partialorder %v782, 1.0
        %v787 = vsel %vm786, 1, 0
        %v788 = vcvt.s32.f32 %v787
        %v789 = vsub.f32 1.0, %v782
        %v790 = vmul.f32 %v789, %v789
        %v791 = vmul.f32 %v790, %v790
        %v792 = vmul.f32 %v791, %v788
        %s793 = scalar_lea.vmem %s757, 48 [#allocation19]
        %v794 = vld [vmem:[%s793] sm:$0xff]
        %v795 = vadd.f32 %v785, 0.0
        %v796 = vadd.f32 %v794, %v795
        %797 = vst [vmem:[%s793] sm:$0xff] %v796
        %v798 = vld [vmem:[%s625] sm:$0xff]
        %v799 = vand.u32 2147483647, %v798
        %v800 = vsub.f32 0.0, %v799
        %v801 = vmul.f32 %v800, 1.442695
        %v802 = vpow.pop %v801
        %v803 = vadd.f32 %v802, 1.0
        %v804 = vlog2.pop %v803
        %v805 = vmul.f32 %v804, 0.6931472
        %v806 = vmin.f32 %v798, 0.0
        %v807 = vsub.f32 %v806, %v805
        %v808 = vsub.f32 0.0, %v798
        %v809 = vmin.f32 %v808, 0.0
        %v810 = vsub.f32 %v809, %v805
        %vm811 = vcmp.ge.f32.partialorder %v798, 0.0
        %v812 = vsel %vm811, 1.0, %v802
        %v813 = vrcp.pop %v803
        %v814 = vmul.f32 %v812, %v813
        %vm815 = vcmp.lt.f32.partialorder %v814, 0.0001
        %vm816 = vcmp.gt.f32.partialorder %v814, 0.9999
        %v817 = vmax.f32 %v814, 0.0001
        %v818 = vmin.f32 %v817, 0.9999
        %v819 = vsel %vm816, -0.000100005, %v807
        %v820 = vsel %vm815, -9.2103405, %v819
        %v821 = vsel %vm815, -0.000100005, %v810
        %v822 = vsel %vm816, -9.2103405, %v821
        %v823 = vsub.f32 1.0, %v818
        %v824 = vmul.f32 %v823, %v823
        %v825 = vmul.f32 %v820, %v824
        %v826 = vmul.f32 %v825, %v785
        %v827 = vmul.f32 %v818, %v818
        %v828 = vmul.f32 %v822, %v827
        %v829 = vmul.f32 %v828, %v792
        %v830 = vadd.f32 %v826, %v829
        %v831 = vld [vmem:[%s757] sm:$0xff]
        %v832 = vadd.f32 %v830, 0.0
        %v833 = vadd.f32 %v831, %v832
        %834 = vst [vmem:[%s757] sm:$0xff] %v833
        %v835 = vld [vmem:[%s635] sm:$0xff]
        %v836 = vand.u32 2147483647, %v835
        %v837 = vsub.f32 0.0, %v836
        %v838 = vmul.f32 %v837, 1.442695
        %v839 = vpow.pop %v838
        %v840 = vadd.f32 %v839, 1.0
        %v841 = vlog2.pop %v840
        %v842 = vmul.f32 %v841, 0.6931472
        %v843 = vmin.f32 %v835, 0.0
        %v844 = vsub.f32 %v843, %v842
        %v845 = vsub.f32 0.0, %v835
        %v846 = vmin.f32 %v845, 0.0
        %v847 = vsub.f32 %v846, %v842
        %vm848 = vcmp.ge.f32.partialorder %v835, 0.0
        %v849 = vsel %vm848, 1.0, %v839
        %v850 = vrcp.pop %v840
        %v851 = vmul.f32 %v849, %v850
        %vm852 = vcmp.lt.f32.partialorder %v851, 0.0001
        %vm853 = vcmp.gt.f32.partialorder %v851, 0.9999
        %v854 = vmax.f32 %v851, 0.0001
        %v855 = vmin.f32 %v854, 0.9999
        %v856 = vsel %vm853, -0.000100005, %v844
        %v857 = vsel %vm852, -9.2103405, %v856
        %v858 = vsel %vm852, -0.000100005, %v847
        %v859 = vsel %vm853, -9.2103405, %v858
        %v860 = vsub.f32 1.0, %v855
        %v861 = vmul.f32 %v860, %v860
        %v862 = vmul.f32 %v857, %v861
        %v863 = vmul.f32 %v862, %v785
        %v864 = vmul.f32 %v855, %v855
        %v865 = vmul.f32 %v859, %v864
        %v866 = vmul.f32 %v865, %v792
        %v867 = vadd.f32 %v863, %v866
        %s868 = scalar_lea.vmem %s757, 8 [#allocation19]
        %v869 = vld [vmem:[%s868] sm:$0xff]
        %v870 = vadd.f32 %v867, 0.0
        %v871 = vadd.f32 %v869, %v870
        %872 = vst [vmem:[%s868] sm:$0xff] %v871
        %v873 = vld [vmem:[%s595] sm:$0xff]
        %vm874 = vcmp.eq.f32.partialorder %v873, 1.0
        %v875 = vsel %vm874, 1, 0
        %v876 = vcvt.s32.f32 %v875
        %vm877 = vcmp.lt.f32.partialorder %v873, 1.0
        %v878 = vsel %vm877, 1, 0
        %v879 = vcvt.s32.f32 %v878
        %v880 = vsub.f32 1.0, %v873
        %v881 = vmul.f32 %v880, %v880
        %v882 = vmul.f32 %v881, %v881
        %v883 = vmul.f32 %v882, %v879
        %s884 = scalar_lea.vmem %s757, 56 [#allocation19]
        %v885 = vld [vmem:[%s884] sm:$0xff]
        %v886 = vadd.f32 %v876, 0.0
        %v887 = vadd.f32 %v885, %v886
        %888 = vst [vmem:[%s884] sm:$0xff] %v887
        %v889 = vld [vmem:[%s645] sm:$0xff]
        %v890 = vand.u32 2147483647, %v889
        %v891 = vsub.f32 0.0, %v890
        %v892 = vmul.f32 %v891, 1.442695
        %v893 = vpow.pop %v892
        %v894 = vadd.f32 %v893, 1.0
        %v895 = vlog2.pop %v894
        %v896 = vmul.f32 %v895, 0.6931472
        %v897 = vmin.f32 %v889, 0.0
        %v898 = vsub.f32 %v897, %v896
        %v899 = vsub.f32 0.0, %v889
        %v900 = vmin.f32 %v899, 0.0
        %v901 = vsub.f32 %v900, %v896
        %vm902 = vcmp.ge.f32.partialorder %v889, 0.0
        %v903 = vsel %vm902, 1.0, %v893
        %v904 = vrcp.pop %v894
        %v905 = vmul.f32 %v903, %v904
        %vm906 = vcmp.lt.f32.partialorder %v905, 0.0001
        %vm907 = vcmp.gt.f32.partialorder %v905, 0.9999
        %v908 = vmax.f32 %v905, 0.0001
        %v909 = vmin.f32 %v908, 0.9999
        %v910 = vsel %vm907, -0.000100005, %v898
        %v911 = vsel %vm906, -9.2103405, %v910
        %v912 = vsel %vm906, -0.000100005, %v901
        %v913 = vsel %vm907, -9.2103405, %v912
        %v914 = vsub.f32 1.0, %v909
        %v915 = vmul.f32 %v914, %v914
        %v916 = vmul.f32 %v911, %v915
        %v917 = vmul.f32 %v916, %v876
        %v918 = vmul.f32 %v909, %v909
        %v919 = vmul.f32 %v913, %v918
        %v920 = vmul.f32 %v919, %v883
        %v921 = vadd.f32 %v917, %v920
        %s922 = scalar_lea.vmem %s757, 16 [#allocation19]
        %v923 = vld [vmem:[%s922] sm:$0xff]
        %v924 = vadd.f32 %v921, 0.0
        %v925 = vadd.f32 %v923, %v924
        %926 = vst [vmem:[%s922] sm:$0xff] %v925
        %v927 = vld [vmem:[%s655] sm:$0xff]
        %v928 = vand.u32 2147483647, %v927
        %v929 = vsub.f32 0.0, %v928
        %v930 = vmul.f32 %v929, 1.442695
        %v931 = vpow.pop %v930
        %v932 = vadd.f32 %v931, 1.0
        %v933 = vlog2.pop %v932
        %v934 = vmul.f32 %v933, 0.6931472
        %v935 = vmin.f32 %v927, 0.0
        %v936 = vsub.f32 %v935, %v934
        %v937 = vsub.f32 0.0, %v927
        %v938 = vmin.f32 %v937, 0.0
        %v939 = vsub.f32 %v938, %v934
        %vm940 = vcmp.ge.f32.partialorder %v927, 0.0
        %v941 = vsel %vm940, 1.0, %v931
        %v942 = vrcp.pop %v932
        %v943 = vmul.f32 %v941, %v942
        %vm944 = vcmp.lt.f32.partialorder %v943, 0.0001
        %vm945 = vcmp.gt.f32.partialorder %v943, 0.9999
        %v946 = vmax.f32 %v943, 0.0001
        %v947 = vmin.f32 %v946, 0.9999
        %v948 = vsel %vm945, -0.000100005, %v936
        %v949 = vsel %vm944, -9.2103405, %v948
        %v950 = vsel %vm944, -0.000100005, %v939
        %v951 = vsel %vm945, -9.2103405, %v950
        %v952 = vsub.f32 1.0, %v947
        %v953 = vmul.f32 %v952, %v952
        %v954 = vmul.f32 %v949, %v953
        %v955 = vmul.f32 %v954, %v876
        %v956 = vmul.f32 %v947, %v947
        %v957 = vmul.f32 %v951, %v956
        %v958 = vmul.f32 %v957, %v883
        %v959 = vadd.f32 %v955, %v958
        %s960 = scalar_lea.vmem %s757, 24 [#allocation19]
        %v961 = vld [vmem:[%s960] sm:$0xff]
        %v962 = vadd.f32 %v959, 0.0
        %v963 = vadd.f32 %v961, %v962
        %964 = vst [vmem:[%s960] sm:$0xff] %v963
        %v965 = vld [vmem:[%s605] sm:$0xff]
        %vm966 = vcmp.eq.f32.partialorder %v965, 1.0
        %v967 = vsel %vm966, 1, 0
        %v968 = vcvt.s32.f32 %v967
        %vm969 = vcmp.lt.f32.partialorder %v965, 1.0
        %v970 = vsel %vm969, 1, 0
        %v971 = vcvt.s32.f32 %v970
        %v972 = vsub.f32 1.0, %v965
        %v973 = vmul.f32 %v972, %v972
        %v974 = vmul.f32 %v973, %v973
        %v975 = vmul.f32 %v974, %v971
        %s976 = scalar_lea.vmem %s757, 64 [#allocation19]
        %v977 = vld [vmem:[%s976] sm:$0xff]
        %v978 = vadd.f32 %v968, 0.0
        %v979 = vadd.f32 %v977, %v978
        %980 = vst [vmem:[%s976] sm:$0xff] %v979
        %v981 = vld [vmem:[%s665] sm:$0xff]
        %v982 = vlog2.pop %v981
        %v983 = vmul.f32 %v982, 0.6931472
        %v984 = vsub.f32 1.0, %v981
        %v985 = vlog2.pop %v984
        %v986 = vmul.f32 %v985, 0.6931472
        %v987 = vmul.f32 %v984, %v984
        %v988 = vmul.f32 %v983, %v987
        %v989 = vmul.f32 %v988, %v968
        %v990 = vmul.f32 %v981, %v981
        %v991 = vmul.f32 %v986, %v990
        %v992 = vmul.f32 %v991, %v975
        %v993 = vadd.f32 %v989, %v992
        %s994 = scalar_lea.vmem %s757, 32 [#allocation19]
        %v995 = vld [vmem:[%s994] sm:$0xff]
        %v996 = vadd.f32 %v993, 0.0
        %v997 = vadd.f32 %v995, %v996
        %998 = vst [vmem:[%s994] sm:$0xff] %v997
        %v999 = vld [vmem:[%s615] sm:$0xff]
        %vm1000 = vcmp.eq.f32.partialorder %v999, 1.0
        %v1001 = vsel %vm1000, 1, 0
        %v1002 = vcvt.s32.f32 %v1001
        %vm1003 = vcmp.lt.f32.partialorder %v999, 1.0
        %v1004 = vsel %vm1003, 1, 0
        %v1005 = vcvt.s32.f32 %v1004
        %v1006 = vsub.f32 1.0, %v999
        %v1007 = vmul.f32 %v1006, %v1006
        %v1008 = vmul.f32 %v1007, %v1007
        %v1009 = vmul.f32 %v1008, %v1005
        %s1010 = scalar_lea.vmem %s757, 72 [#allocation19]
        %v1011 = vld [vmem:[%s1010] sm:$0xff]
        %v1012 = vadd.f32 %v1002, 0.0
        %v1013 = vadd.f32 %v1011, %v1012
        %1014 = vst [vmem:[%s1010] sm:$0xff] %v1013
        %v1015 = vld [vmem:[%s675] sm:$0xff]
        %v1016 = vlog2.pop %v1015
        %v1017 = vmul.f32 %v1016, 0.6931472
        %v1018 = vsub.f32 1.0, %v1015
        %v1019 = vlog2.pop %v1018
        %v1020 = vmul.f32 %v1019, 0.6931472
        %v1021 = vmul.f32 %v1018, %v1018
        %v1022 = vmul.f32 %v1017, %v1021
        %v1023 = vmul.f32 %v1022, %v1002
        %v1024 = vmul.f32 %v1015, %v1015
        %v1025 = vmul.f32 %v1020, %v1024
        %v1026 = vmul.f32 %v1025, %v1009
        %v1027 = vadd.f32 %v1023, %v1026
        %s1028 = scalar_lea.vmem %s757, 40 [#allocation19]
        %v1029 = vld [vmem:[%s1028] sm:$0xff]
        %v1030 = vadd.f32 %v1027, 0.0
        %v1031 = vadd.f32 %v1029, %v1030
        %1032 = vst [vmem:[%s1028] sm:$0xff] %v1031
        %s1033 = sand.u32 %s342, 1
        %s1034 = scalar_lea.sflag [#allocation4], %s1033
        %s1035 = sand.u32 %s342, 1
        %s1036 = smul.addr %s1035, 80
        %s1037 = scalar_lea.vmem [#allocation19], %s1036
        // Predicated region
        $region105: #{tpu_custom_call.1} parent=59 // pred_check
          %p1038 = pneg %p352
        $region106: #{tpu_custom_call.1} parent=59 // pred_check_branch
          %1040 = sbr.rel (%p1038) target = $region108
        $region107: #{tpu_custom_call.1} parent=59 // pred_region
          %1042 = vsyncadd %s1034, 0
          %s1043 = smul.addr %s46, 10
          %s1044 = smul.addr %s1043, 8
          %s1045 = scalar_lea.hbm %s10, %s1044
          %s1046 = sshll.u32 %s1037, 4
          %s1047 = int_to_ptr.vmem [resolvable:$true] %s1046
          %s1048 = sshll.u32 %s1045, 4
          %s1049 = int_to_ptr.hbm [resolvable:$true] %s1048
          %1054 = dma.vmem_to_hbm [thread:$0]  %s1047, 1280, %s1049, %s1034, 128, 128, 8
        $region108: #{tpu_custom_call.1} parent=59 // pred_fallthru
          _
      $region60: #{tpu_custom_call.1} parent=5 // pred_fallthru
        _
      %p1055 = scmp.le.s32.totalorder 2, %s37
      // Predicated region
      $region109: #{tpu_custom_call.1} parent=5 // pred_check
        %p1056 = pneg %p1055
      $region110: #{tpu_custom_call.1} parent=5 // pred_check_branch
        %1058 = sbr.rel (%p1056) target = $region112
      $region111: #{tpu_custom_call.1} parent=5 // pred_region
        %s1059 = ssub.s32 %s37, 2
        // Predicated region
        $region113: #{tpu_custom_call.1} parent=111 // pred_check
          %p1060 = pneg %p358
        $region114: #{tpu_custom_call.1} parent=111 // pred_check_branch
          %1062 = sbr.rel (%p1060) target = $region116
        $region115: #{tpu_custom_call.1} parent=111 // pred_region
          %s1063 = sand.u32 %s343, 1
          %s1064 = scalar_lea.sflag [#allocation4], %s1063
          %s1065 = sand.u32 %s343, 1
          %s1066 = smul.addr %s1065, 80
          %s1067 = scalar_lea.vmem [#allocation19], %s1066
          %1069 = dma.done %s1064, 1280
        $region116: #{tpu_custom_call.1} parent=111 // pred_fallthru
          _
      $region112: #{tpu_custom_call.1} parent=5 // pred_fallthru
        _
    $region6: #{tpu_custom_call.1} parent=1 // loop_footer
      %s41 = sadd.s32 1, %s37
    $region7: #{tpu_custom_call.1} parent=1 // loop_footer_branch
      %36 = sbr.rel target = $region3
    $region8: #{tpu_custom_call.1} parent=1 // loop_exit
      _
    %1070 = vsyncpa [#allocation3], 1
    %s1071 = scalar_lea.sflag [#allocation3], 1
    %1072 = vsyncpa %s1071, 1
    %1073 = vsyncpa [#allocation6], 1
    %s1074 = scalar_lea.sflag [#allocation6], 1
    %1075 = vsyncpa %s1074, 1
    %1076 = vsyncpa [#allocation9], 1
    %s1077 = scalar_lea.sflag [#allocation9], 1
    %1078 = vsyncpa %s1077, 1
    %1079 = vsyncpa [#allocation12], 1
    %s1080 = scalar_lea.sflag [#allocation12], 1
    %1081 = vsyncpa %s1080, 1
    %1082 = vsyncpa [#allocation15], 1
    %s1083 = scalar_lea.sflag [#allocation15], 1
    %1084 = vsyncpa %s1083, 1
    %1085 = vsyncpa [#allocation18], 1
    %s1086 = scalar_lea.sflag [#allocation18], 1
    %1087 = vsyncpa %s1086, 1
    %1088 = vsyncpa [#allocation4], 1
    %s1089 = scalar_lea.sflag [#allocation4], 1
    %1090 = vsyncpa %s1089, 1

</llo_original>
